<compile_context>
chip_gen: v6e
topology: v6e:2x2x1
jax: 0.10.0
libtpu: 0.0.40
codegen_flags: <defaults>
</compile_context>

<pallas_src>
import functools

import jax
import jax.numpy as jnp
from jax.experimental import pallas as pl
from jax.experimental.pallas import tpu as pltpu


def _round_up(a, b):
    return (a + b - 1) // b * b


def _vmem_capacity_bytes():
    try:
        return int(pltpu.get_tpu_info().vmem_capacity_bytes)
    except Exception:
        return 64 * 1024 * 1024  # conservative default (v7x per-core VMEM)


def _set2set_kernel(x_ref, batch_ref, w1_ref, w2_ref, bias_ref, out_ref,
                    h_ref, c_ref, r_ref, qb_ref, m_ref, l_ref, racc_ref,
                    *, tile_n, resident):
    t = pl.program_id(0)                 # processing step
    n = pl.program_id(1)                 # node tile
    n_steps = pl.num_programs(0)
    n_tiles = pl.num_programs(1)

    b_pad, H = h_ref.shape

    @pl.when((t == 0) & (n == 0))
    def _init_state():
        h_ref[...] = jnp.zeros_like(h_ref)
        c_ref[...] = jnp.zeros_like(c_ref)
        r_ref[...] = jnp.zeros_like(r_ref)

    @pl.when(n == 0)
    def _lstm_step():
        # q_{t-1} == h_{t-1}, so q_star @ W_ih^T + h @ W_hh^T collapses to
        # h @ W1 + r @ W2 (W1 = W_ih^T[:H] + W_hh^T, W2 = W_ih^T[H:]).
        # Gate columns are pre-permuted to [i, f, o, g].  f32 operands keep the
        # recurrence accurate over processing steps (tiny matmuls, cheap).
        gates = (jnp.dot(h_ref[...], w1_ref[...],
                         preferred_element_type=jnp.float32)
                 + jnp.dot(r_ref[...], w2_ref[...],
                           preferred_element_type=jnp.float32)
                 + bias_ref[...])                                  # (B, 4H)
        sig = jax.nn.sigmoid(gates[:, :3 * H])                     # i, f, o only
        i_g = sig[:, 0:H]
        f_g = sig[:, H:2 * H]
        o_g = sig[:, 2 * H:3 * H]
        g_g = jnp.tanh(gates[:, 3 * H:4 * H])
        c_new = f_g * c_ref[...] + i_g * g_g
        c_ref[...] = c_new
        h_new = o_g * jnp.tanh(c_new)                              # q_t = h_t
        h_ref[...] = h_new
        qb_ref[...] = h_new.astype(jnp.bfloat16)                   # cached bf16 q
        # reset online-softmax accumulators for this processing step
        m_ref[...] = jnp.full_like(m_ref, -1e30)
        l_ref[...] = jnp.zeros_like(l_ref)
        racc_ref[...] = jnp.zeros_like(racc_ref)

    # ---- attention over this node tile, lane-dense (B, TILE_N) ----
    if resident:
        start = pl.multiple_of(n * tile_n, 128)
        x_tile = x_ref[pl.ds(start, tile_n), :]                    # (TILE_N, H) bf16
        ids = batch_ref[:, pl.ds(start, tile_n)]                   # (1, TILE_N)
    else:
        x_tile = x_ref[...]
        ids = batch_ref[...]

    q = qb_ref[...]                                                # (B, H) bf16
    scores = jax.lax.dot_general(
        q, x_tile, (((1,), (1,)), ((), ())),
        preferred_element_type=jnp.float32)                        # (B, TILE_N)
    gid = jax.lax.broadcasted_iota(jnp.int32, (b_pad, tile_n), 0)
    mask = gid == ids                                              # (B, TILE_N)
    scores = jnp.where(mask, scores, jnp.float32(-1e30))

    m_prev = m_ref[...]                                            # (B, 1)
    m_new = jnp.maximum(m_prev, jnp.max(scores, axis=-1, keepdims=True))
    corr = jnp.exp(m_prev - m_new)                                 # (B, 1)
    # NOTE: this second mask is load-bearing — for a graph with no nodes in a
    # tile, exp(scores - m_new) would be 1 and corrupt l/racc without it.
    p = jnp.where(mask, jnp.exp(scores - m_new), 0.0)              # (B, TILE_N)
    l_ref[...] = corr * l_ref[...] + jnp.sum(p, axis=-1, keepdims=True)
    racc_ref[...] = corr * racc_ref[...] + jnp.dot(
        p.astype(jnp.bfloat16), x_tile, preferred_element_type=jnp.float32)
    m_ref[...] = m_new

    @pl.when(n == n_tiles - 1)
    def _finalize_step():
        l = l_ref[...]
        safe_l = jnp.where(l > 0.0, l, 1.0)                        # empty graphs -> r = 0
        r_ref[...] = racc_ref[...] * pl.reciprocal(safe_l, approx=True)

    # Correct only because the out BlockSpec index is constant (one final write).
    @pl.when((n == n_tiles - 1) & (t == n_steps - 1))
    def _write_out():
        out_ref[...] = jnp.concatenate([h_ref[...], r_ref[...]], axis=-1)


def set2set(x, batch, w_ih, w_hh, b_ih, b_hh, processing_steps, batch_size):
    N, D = x.shape
    H = D
    B = int(batch_size)
    b_pad = _round_up(B, 8)

    # Node tile: lane dim multiple of 128, bounded by vreg pressure
    # (~4 live (b_pad, tile_n) f32 intermediates kept under ~192 KiB).
    tile_cap = max(128, min(2048, ((192 * 1024) // (16 * b_pad)) // 128 * 128))
    tile_n = min(tile_cap, _round_up(max(N, 1), 128))
    n_pad = _round_up(max(N, 1), tile_n)
    num_tiles = n_pad // tile_n

    # ---- generation-aware VMEM budget & residency decision ----
    vmem_cap = _vmem_capacity_bytes()
    x_bytes = n_pad * D * 2                                # bf16, single buffer
    ids_bytes = 8 * n_pad * 4                              # (1, n_pad) i32, 8-sublane pad
    w_bytes = 2 * H * 4 * H * 4 + 8 * 4 * H * 4            # f32 W1, W2 + padded bias
    scratch_bytes = (4 * b_pad * H + 2 * b_pad * 128) * 4 + b_pad * H * 2
    out_bytes = 2 * b_pad * max(2 * H, 128) * 4
    fixed_bytes = w_bytes + scratch_bytes + out_bytes
    resident = (x_bytes + ids_bytes + fixed_bytes) <= int(vmem_cap * 0.5)

    if resident:
        stream_bytes = x_bytes + ids_bytes
    else:
        stream_bytes = 3 * (tile_n * D * 2 + 8 * tile_n * 4)
    vmem_limit = min(int(vmem_cap * 0.75),
                     max(32 * 1024 * 1024,
                         2 * (fixed_bytes + stream_bytes) + (8 << 20)))

    # ---- host-side data prep ----
    x_p = jnp.zeros((n_pad, D), jnp.bfloat16).at[:N].set(
        jnp.asarray(x, jnp.float32).astype(jnp.bfloat16))
    # Padded nodes get an out-of-range graph id so they are fully masked.
    batch_p = jnp.full((1, n_pad), b_pad, jnp.int32).at[0, :N].set(
        jnp.asarray(batch, jnp.int32))

    w_ih = jnp.asarray(w_ih, jnp.float32)                  # (4H, 2H), rows [i;f;g;o]
    w_hh = jnp.asarray(w_hh, jnp.float32)                  # (4H, H)
    w1 = (w_ih[:, :H] + w_hh).T                            # (H, 4H), cols [i|f|g|o]
    w2 = w_ih[:, H:].T                                     # (H, 4H)
    bias = (jnp.asarray(b_ih, jnp.float32)
            + jnp.asarray(b_hh, jnp.float32)).reshape(1, 4 * H)

    def _perm_gates(w):  # [i, f, g, o] -> [i, f, o, g]: sigmoid covers first 3H cols
        return jnp.concatenate(
            [w[..., :2 * H], w[..., 3 * H:4 * H], w[..., 2 * H:3 * H]], axis=-1)

    w1, w2, bias = _perm_gates(w1), _perm_gates(w2), _perm_gates(bias)

    kernel = functools.partial(_set2set_kernel, tile_n=tile_n, resident=resident)

    def _in_specs(use_pm):
        def spec(shape, index_map, bufs=None):
            if use_pm and bufs is not None:
                return pl.BlockSpec(shape, index_map,
                                    pipeline_mode=pl.Buffered(bufs))
            return pl.BlockSpec(shape, index_map)

        if resident:
            x_spec = spec((n_pad, D), lambda t, n: (0, 0), 1)     # resident, 1 buffer
            b_spec = spec((1, n_pad), lambda t, n: (0, 0), 1)
        else:
            x_spec = spec((tile_n, D), lambda t, n: (n, 0), 3)    # streamed, 3-deep
            b_spec = spec((1, tile_n), lambda t, n: (0, n), 3)
        return [
            x_spec,
            b_spec,
            spec((H, 4 * H), lambda t, n: (0, 0), 1),             # W1 (resident)
            spec((H, 4 * H), lambda t, n: (0, 0), 1),             # W2 (resident)
            spec((1, 4 * H), lambda t, n: (0, 0), 1),             # fused bias
        ]

    def _run(use_pm):
        return pl.pallas_call(
            kernel,
            out_shape=jax.ShapeDtypeStruct((b_pad, 2 * H), jnp.float32),
            grid_spec=pltpu.PrefetchScalarGridSpec(
                num_scalar_prefetch=0,
                grid=(processing_steps, num_tiles),
                in_specs=_in_specs(use_pm),
                out_specs=pl.BlockSpec((b_pad, 2 * H), lambda t, n: (0, 0)),
                scratch_shapes=[
                    pltpu.VMEM((b_pad, H), jnp.float32),   # h (== q)
                    pltpu.VMEM((b_pad, H), jnp.float32),   # c
                    pltpu.VMEM((b_pad, H), jnp.float32),   # r (previous readout)
                    pltpu.VMEM((b_pad, H), jnp.bfloat16),  # cached bf16 q
                    pltpu.VMEM((b_pad, 1), jnp.float32),   # online-softmax running max
                    pltpu.VMEM((b_pad, 1), jnp.float32),   # online-softmax running denom
                    pltpu.VMEM((b_pad, H), jnp.float32),   # online weighted-sum acc
                ]),
            compiler_params=pltpu.CompilerParams(
                dimension_semantics=("arbitrary", "arbitrary"),
                vmem_limit_bytes=vmem_limit),
        )(x_p, batch_p, w1, w2, bias)

    try:
        out = jax.block_until_ready(_run(True))
    except Exception:
        # pipeline_mode / Buffered(1) not available in this JAX: fall back to
        # default double-buffering (same semantics, just more VMEM).
        out = jax.block_until_ready(_run(False))
    return out[:B]


def set2set_ref(x, batch, w_ih, w_hh, b_ih, b_hh, processing_steps, batch_size):
    """Pure-JAX reference (mirrors the PyTorch forward, num_layers=1)."""
    N, D = x.shape
    B = batch_size
    hp = jax.lax.Precision.HIGHEST
    h = jnp.zeros((B, D), jnp.float32)
    c = jnp.zeros((B, D), jnp.float32)
    q_star = jnp.zeros((B, 2 * D), jnp.float32)
    for _ in range(processing_steps):
        gates = (jnp.dot(q_star, w_ih.T, precision=hp)
                 + jnp.dot(h, w_hh.T, precision=hp) + b_ih + b_hh)
        i_g = jax.nn.sigmoid(gates[:, 0:D])
        f_g = jax.nn.sigmoid(gates[:, D:2 * D])
        g_g = jnp.tanh(gates[:, 2 * D:3 * D])
        o_g = jax.nn.sigmoid(gates[:, 3 * D:4 * D])
        c = f_g * c + i_g * g_g
        h = o_g * jnp.tanh(c)
        q = h
        e = jnp.sum(x * q[batch], axis=-1)
        m = jax.ops.segment_max(e, batch, num_segments=B)
        ex = jnp.exp(e - m[batch])
        denom = jax.ops.segment_sum(ex, batch, num_segments=B)
        a = ex / denom[batch]
        r = jax.ops.segment_sum(a[:, None] * x, batch, num_segments=B)
        q_star = jnp.concatenate([q, r], axis=-1)
    return q_star


if __name__ == "__main__":
    key = jax.random.PRNGKey(0)
    D = 32               # in_feats
    T = 3                # processing_steps
    N = 16               # total nodes
    B = 2                # number of graphs (batch.max() + 1)
    batch = jnp.array([0] * 7 + [1] * 9, dtype=jnp.int32)

    k1, k2, k3, k4, k5 = jax.random.split(key, 5)
    bound = 1.0 / (D ** 0.5)   # PyTorch LSTM reset_parameters: U(-1/sqrt(H), 1/sqrt(H))
    w_ih = jax.random.uniform(k1, (4 * D, 2 * D), jnp.float32, -bound, bound)
    w_hh = jax.random.uniform(k2, (4 * D, D), jnp.float32, -bound, bound)
    b_ih = jax.random.uniform(k3, (4 * D,), jnp.float32, -bound, bound)
    b_hh = jax.random.uniform(k4, (4 * D,), jnp.float32, -bound, bound)
    x = jax.random.normal(k5, (N, D), dtype=jnp.float32)

    out = set2set(x, batch, w_ih, w_hh, b_ih, b_hh, T, B)
    out = jax.block_until_ready(out)

    ref = set2set_ref(x, batch, w_ih, w_hh, b_ih, b_hh, T, B)
    assert out.shape == (B, 2 * D), out.shape
    assert jnp.allclose(out, ref, rtol=5e-2, atol=5e-2), \
        f"max abs err {jnp.max(jnp.abs(out - ref))}"
    print("KERNEL_OK")
</pallas_src>

<mosaic_0001>
module attributes {stable_mosaic.version = 11 : i64} {
  func.func @_set2set_kernel(%arg0: i32, %arg1: i32, %arg2: memref<128x32xbf16, #tpu.memory_space<vmem>>, %arg3: memref<1x128xi32, #tpu.memory_space<vmem>>, %arg4: memref<32x128xf32, #tpu.memory_space<vmem>>, %arg5: memref<32x128xf32, #tpu.memory_space<vmem>>, %arg6: memref<1x128xf32, #tpu.memory_space<vmem>>, %arg7: memref<8x64xf32, #tpu.memory_space<vmem>>, %arg8: memref<8x32xf32, #tpu.memory_space<vmem>>, %arg9: memref<8x32xf32, #tpu.memory_space<vmem>>, %arg10: memref<8x32xf32, #tpu.memory_space<vmem>>, %arg11: memref<8x32xbf16, #tpu.memory_space<vmem>>, %arg12: memref<8x1xf32, #tpu.memory_space<vmem>>, %arg13: memref<8x1xf32, #tpu.memory_space<vmem>>, %arg14: memref<8x32xf32, #tpu.memory_space<vmem>>) attributes {dimension_semantics = [#tpu.dimension_semantics<arbitrary>, #tpu.dimension_semantics<arbitrary>], iteration_bounds = array<i64: 3, 1>, scalar_prefetch = 0 : i64, scratch_operands = 7 : i64, tpu.core_type = #tpu.core_type<tc>, window_params = [{pipeline_mode = #tpu.pipeline_mode<synchronous>, transform_indices = @transform_0, window_bounds = array<i64: 128, 32>}, {pipeline_mode = #tpu.pipeline_mode<synchronous>, transform_indices = @transform_1, window_bounds = array<i64: 1, 128>}, {pipeline_mode = #tpu.pipeline_mode<synchronous>, transform_indices = @transform_2, window_bounds = array<i64: 32, 128>}, {pipeline_mode = #tpu.pipeline_mode<synchronous>, transform_indices = @transform_3, window_bounds = array<i64: 32, 128>}, {pipeline_mode = #tpu.pipeline_mode<synchronous>, transform_indices = @transform_4, window_bounds = array<i64: 1, 128>}, {pipeline_mode = #tpu.pipeline_mode<synchronous>, transform_indices = @transform_5, window_bounds = array<i64: 8, 64>}]} {
    %c0_i32 = arith.constant 0 : i32
    %0 = arith.cmpi eq, %arg0, %c0_i32 : i32
    %c0_i32_0 = arith.constant 0 : i32
    %1 = arith.cmpi eq, %arg1, %c0_i32_0 : i32
    %2 = arith.andi %0, %1 : i1
    %3 = arith.extui %2 : i1 to i32
    %c0_i32_1 = arith.constant 0 : i32
    %4 = arith.cmpi ne, %3, %c0_i32_1 : i32
    scf.if %4 {
      %cst_28 = arith.constant 0.000000e+00 : f32
      %54 = vector.broadcast %cst_28 : f32 to vector<8x32xf32>
      %c0_29 = arith.constant 0 : index
      %c0_30 = arith.constant 0 : index
      %55 = vector.load %arg8[%c0_29, %c0_30] : memref<8x32xf32, #tpu.memory_space<vmem>>, vector<8x32xf32>
      tpu.vector_store %arg8[%c0_29, %c0_30], %54 {strides = array<i32>} : memref<8x32xf32, #tpu.memory_space<vmem>>, vector<8x32xf32>,
      %cst_31 = arith.constant 0.000000e+00 : f32
      %56 = vector.broadcast %cst_31 : f32 to vector<8x32xf32>
      %c0_32 = arith.constant 0 : index
      %c0_33 = arith.constant 0 : index
      %57 = vector.load %arg9[%c0_32, %c0_33] : memref<8x32xf32, #tpu.memory_space<vmem>>, vector<8x32xf32>
      tpu.vector_store %arg9[%c0_32, %c0_33], %56 {strides = array<i32>} : memref<8x32xf32, #tpu.memory_space<vmem>>, vector<8x32xf32>,
      %cst_34 = arith.constant 0.000000e+00 : f32
      %58 = vector.broadcast %cst_34 : f32 to vector<8x32xf32>
      %c0_35 = arith.constant 0 : index
      %c0_36 = arith.constant 0 : index
      %59 = vector.load %arg10[%c0_35, %c0_36] : memref<8x32xf32, #tpu.memory_space<vmem>>, vector<8x32xf32>
      tpu.vector_store %arg10[%c0_35, %c0_36], %58 {strides = array<i32>} : memref<8x32xf32, #tpu.memory_space<vmem>>, vector<8x32xf32>,
    } else {
    }
    %c0_i32_2 = arith.constant 0 : i32
    %5 = arith.cmpi eq, %arg1, %c0_i32_2 : i32
    %6 = arith.extui %5 : i1 to i32
    %c0_i32_3 = arith.constant 0 : i32
    %7 = arith.cmpi ne, %6, %c0_i32_3 : i32
    scf.if %7 {
      %c0_28 = arith.constant 0 : index
      %c0_29 = arith.constant 0 : index
      %54 = vector.load %arg8[%c0_28, %c0_29] : memref<8x32xf32, #tpu.memory_space<vmem>>, vector<8x32xf32>
      %c0_30 = arith.constant 0 : index
      %c0_31 = arith.constant 0 : index
      %55 = vector.load %arg4[%c0_30, %c0_31] : memref<32x128xf32, #tpu.memory_space<vmem>>, vector<32x128xf32>
      %cst_32 = arith.constant dense<0.000000e+00> : vector<8x128xf32>
      %56 = tpu.matmul %54, %55, %cst_32 {dimension_numbers = #tpu.dot_dimension_numbers<[1], [0], [0], [1], [0, 0, 1, 1], [], []>} : vector<8x32xf32>, vector<32x128xf32>, vector<8x128xf32> -> vector<8x128xf32>
      %c0_33 = arith.constant 0 : index
      %c0_34 = arith.constant 0 : index
      %57 = vector.load %arg10[%c0_33, %c0_34] : memref<8x32xf32, #tpu.memory_space<vmem>>, vector<8x32xf32>
      %c0_35 = arith.constant 0 : index
      %c0_36 = arith.constant 0 : index
      %58 = vector.load %arg5[%c0_35, %c0_36] : memref<32x128xf32, #tpu.memory_space<vmem>>, vector<32x128xf32>
      %cst_37 = arith.constant dense<0.000000e+00> : vector<8x128xf32>
      %59 = tpu.matmul %57, %58, %cst_37 {dimension_numbers = #tpu.dot_dimension_numbers<[1], [0], [0], [1], [0, 0, 1, 1], [], []>} : vector<8x32xf32>, vector<32x128xf32>, vector<8x128xf32> -> vector<8x128xf32>
      %60 = arith.addf %56, %59 : vector<8x128xf32>
      %c0_38 = arith.constant 0 : index
      %c0_39 = arith.constant 0 : index
      %61 = vector.load %arg6[%c0_38, %c0_39] : memref<1x128xf32, #tpu.memory_space<vmem>>, vector<1x128xf32>
      %62 = vector.broadcast %61 : vector<1x128xf32> to vector<8x128xf32>
      %63 = arith.addf %60, %62 : vector<8x128xf32>
      %64 = vector.extract_strided_slice %63 {offsets = [0, 0], sizes = [8, 96], strides = [1, 1]} : vector<8x128xf32> to vector<8x96xf32>
      %65 = arith.negf %64 : vector<8x96xf32>
      %66 = math.exp %65 : vector<8x96xf32>
      %cst_40 = arith.constant 1.000000e+00 : f32
      %67 = vector.broadcast %cst_40 : f32 to vector<8x96xf32>
      %68 = arith.addf %67, %66 : vector<8x96xf32>
      %69 = arith.divf %67, %68 : vector<8x96xf32>
      %70 = vector.extract_strided_slice %69 {offsets = [0, 0], sizes = [8, 32], strides = [1, 1]} : vector<8x96xf32> to vector<8x32xf32>
      %71 = vector.extract_strided_slice %69 {offsets = [0, 32], sizes = [8, 32], strides = [1, 1]} : vector<8x96xf32> to vector<8x32xf32>
      %72 = vector.extract_strided_slice %69 {offsets = [0, 64], sizes = [8, 32], strides = [1, 1]} : vector<8x96xf32> to vector<8x32xf32>
      %73 = vector.extract_strided_slice %63 {offsets = [0, 96], sizes = [8, 32], strides = [1, 1]} : vector<8x128xf32> to vector<8x32xf32>
      %74 = math.tanh %73 : vector<8x32xf32>
      %c0_41 = arith.constant 0 : index
      %c0_42 = arith.constant 0 : index
      %75 = vector.load %arg9[%c0_41, %c0_42] : memref<8x32xf32, #tpu.memory_space<vmem>>, vector<8x32xf32>
      %76 = arith.mulf %71, %75 : vector<8x32xf32>
      %77 = arith.mulf %70, %74 : vector<8x32xf32>
      %78 = arith.addf %76, %77 : vector<8x32xf32>
      %c0_43 = arith.constant 0 : index
      %c0_44 = arith.constant 0 : index
      %79 = vector.load %arg9[%c0_43, %c0_44] : memref<8x32xf32, #tpu.memory_space<vmem>>, vector<8x32xf32>
      tpu.vector_store %arg9[%c0_43, %c0_44], %78 {strides = array<i32>} : memref<8x32xf32, #tpu.memory_space<vmem>>, vector<8x32xf32>,
      %80 = math.tanh %78 : vector<8x32xf32>
      %81 = arith.mulf %72, %80 : vector<8x32xf32>
      %c0_45 = arith.constant 0 : index
      %c0_46 = arith.constant 0 : index
      %82 = vector.load %arg8[%c0_45, %c0_46] : memref<8x32xf32, #tpu.memory_space<vmem>>, vector<8x32xf32>
      tpu.vector_store %arg8[%c0_45, %c0_46], %81 {strides = array<i32>} : memref<8x32xf32, #tpu.memory_space<vmem>>, vector<8x32xf32>,
      %83 = arith.truncf %81 : vector<8x32xf32> to vector<8x32xbf16>
      %c0_47 = arith.constant 0 : index
      %c0_48 = arith.constant 0 : index
      %84 = vector.load %arg11[%c0_47, %c0_48] : memref<8x32xbf16, #tpu.memory_space<vmem>>, vector<8x32xbf16>
      tpu.vector_store %arg11[%c0_47, %c0_48], %83 {strides = array<i32>} : memref<8x32xbf16, #tpu.memory_space<vmem>>, vector<8x32xbf16>,
      %cst_49 = arith.constant -1.000000e+30 : f32
      %85 = vector.broadcast %cst_49 : f32 to vector<8x1xf32>
      %c0_50 = arith.constant 0 : index
      %c0_51 = arith.constant 0 : index
      %86 = vector.load %arg12[%c0_50, %c0_51] : memref<8x1xf32, #tpu.memory_space<vmem>>, vector<8x1xf32>
      tpu.vector_store %arg12[%c0_50, %c0_51], %85 {strides = array<i32>} : memref<8x1xf32, #tpu.memory_space<vmem>>, vector<8x1xf32>,
      %cst_52 = arith.constant 0.000000e+00 : f32
      %87 = vector.broadcast %cst_52 : f32 to vector<8x1xf32>
      %c0_53 = arith.constant 0 : index
      %c0_54 = arith.constant 0 : index
      %88 = vector.load %arg13[%c0_53, %c0_54] : memref<8x1xf32, #tpu.memory_space<vmem>>, vector<8x1xf32>
      tpu.vector_store %arg13[%c0_53, %c0_54], %87 {strides = array<i32>} : memref<8x1xf32, #tpu.memory_space<vmem>>, vector<8x1xf32>,
      %cst_55 = arith.constant 0.000000e+00 : f32
      %89 = vector.broadcast %cst_55 : f32 to vector<8x32xf32>
      %c0_56 = arith.constant 0 : index
      %c0_57 = arith.constant 0 : index
      %90 = vector.load %arg14[%c0_56, %c0_57] : memref<8x32xf32, #tpu.memory_space<vmem>>, vector<8x32xf32>
      tpu.vector_store %arg14[%c0_56, %c0_57], %89 {strides = array<i32>} : memref<8x32xf32, #tpu.memory_space<vmem>>, vector<8x32xf32>,
    } else {
    }
    %c128_i32 = arith.constant 128 : i32
    %8 = arith.muli %arg1, %c128_i32 : i32
    %9 = tpu.assume_multiple %8, 128 : i32
    %10 = arith.index_cast %9 : i32 to index
    %c0 = arith.constant 0 : index
    %11 = vector.load %arg2[%10, %c0] : memref<128x32xbf16, #tpu.memory_space<vmem>>, vector<128x32xbf16>
    %c0_4 = arith.constant 0 : index
    %12 = arith.index_cast %9 : i32 to index
    %13 = vector.load %arg3[%c0_4, %12] : memref<1x128xi32, #tpu.memory_space<vmem>>, vector<1x128xi32>
    %c0_5 = arith.constant 0 : index
    %c0_6 = arith.constant 0 : index
    %14 = vector.load %arg11[%c0_5, %c0_6] : memref<8x32xbf16, #tpu.memory_space<vmem>>, vector<8x32xbf16>
    %cst = arith.constant dense<0.000000e+00> : vector<8x128xf32>
    %15 = tpu.matmul %14, %11, %cst {dimension_numbers = #tpu.dot_dimension_numbers<[1], [1], [0], [0], [0, 0, 1, 0], [], []>} : vector<8x32xbf16>, vector<128x32xbf16>, vector<8x128xf32> -> vector<8x128xf32>
    %16 = tpu.iota {dimensions = array<i32: 0>} : vector<8x128xi32>
    %17 = vector.broadcast %13 : vector<1x128xi32> to vector<8x128xi32>
    %18 = arith.cmpi eq, %16, %17 : vector<8x128xi32>
    %cst_7 = arith.constant -1.000000e+30 : f32
    %19 = vector.broadcast %cst_7 : f32 to vector<8x128xf32>
    %20 = arith.select %18, %15, %19 : vector<8x128xi1>, vector<8x128xf32>
    %c0_8 = arith.constant 0 : index
    %c0_9 = arith.constant 0 : index
    %21 = vector.load %arg12[%c0_8, %c0_9] : memref<8x1xf32, #tpu.memory_space<vmem>>, vector<8x1xf32>
    %cst_10 = arith.constant dense<0xFF800000> : vector<8xf32>
    %22 = vector.multi_reduction <maximumf>, %20, %cst_10 [1] : vector<8x128xf32> to vector<8xf32>
    %23 = vector.shape_cast %22 : vector<8xf32> to vector<8x1xf32>
    %24 = arith.maximumf %21, %23 : vector<8x1xf32>
    %25 = arith.subf %21, %24 : vector<8x1xf32>
    %26 = math.exp %25 : vector<8x1xf32>
    %27 = vector.broadcast %24 : vector<8x1xf32> to vector<8x128xf32>
    %28 = arith.subf %20, %27 : vector<8x128xf32>
    %29 = math.exp %28 : vector<8x128xf32>
    %cst_11 = arith.constant 0.000000e+00 : f32
    %30 = vector.broadcast %cst_11 : f32 to vector<8x128xf32>
    %31 = arith.select %18, %29, %30 : vector<8x128xi1>, vector<8x128xf32>
    %c0_12 = arith.constant 0 : index
    %c0_13 = arith.constant 0 : index
    %32 = vector.load %arg13[%c0_12, %c0_13] : memref<8x1xf32, #tpu.memory_space<vmem>>, vector<8x1xf32>
    %33 = arith.mulf %26, %32 : vector<8x1xf32>
    %cst_14 = arith.constant dense<0.000000e+00> : vector<8xf32>
    %34 = vector.multi_reduction <add>, %31, %cst_14 [1] : vector<8x128xf32> to vector<8xf32>
    %35 = vector.shape_cast %34 : vector<8xf32> to vector<8x1xf32>
    %36 = arith.addf %33, %35 : vector<8x1xf32>
    %c0_15 = arith.constant 0 : index
    %c0_16 = arith.constant 0 : index
    %37 = vector.load %arg13[%c0_15, %c0_16] : memref<8x1xf32, #tpu.memory_space<vmem>>, vector<8x1xf32>
    tpu.vector_store %arg13[%c0_15, %c0_16], %36 {strides = array<i32>} : memref<8x1xf32, #tpu.memory_space<vmem>>, vector<8x1xf32>,
    %c0_17 = arith.constant 0 : index
    %c0_18 = arith.constant 0 : index
    %38 = vector.load %arg14[%c0_17, %c0_18] : memref<8x32xf32, #tpu.memory_space<vmem>>, vector<8x32xf32>
    %39 = vector.broadcast %26 : vector<8x1xf32> to vector<8x32xf32>
    %40 = arith.mulf %39, %38 : vector<8x32xf32>
    %41 = arith.truncf %31 : vector<8x128xf32> to vector<8x128xbf16>
    %cst_19 = arith.constant dense<0.000000e+00> : vector<8x32xf32>
    %42 = tpu.matmul %41, %11, %cst_19 {dimension_numbers = #tpu.dot_dimension_numbers<[1], [0], [0], [1], [0, 0, 1, 1], [], []>} : vector<8x128xbf16>, vector<128x32xbf16>, vector<8x32xf32> -> vector<8x32xf32>
    %43 = arith.addf %40, %42 : vector<8x32xf32>
    %c0_20 = arith.constant 0 : index
    %c0_21 = arith.constant 0 : index
    %44 = vector.load %arg14[%c0_20, %c0_21] : memref<8x32xf32, #tpu.memory_space<vmem>>, vector<8x32xf32>
    tpu.vector_store %arg14[%c0_20, %c0_21], %43 {strides = array<i32>} : memref<8x32xf32, #tpu.memory_space<vmem>>, vector<8x32xf32>,
    %c0_22 = arith.constant 0 : index
    %c0_23 = arith.constant 0 : index
    %45 = vector.load %arg12[%c0_22, %c0_23] : memref<8x1xf32, #tpu.memory_space<vmem>>, vector<8x1xf32>
    tpu.vector_store %arg12[%c0_22, %c0_23], %24 {strides = array<i32>} : memref<8x1xf32, #tpu.memory_space<vmem>>, vector<8x1xf32>,
    %c0_i32_24 = arith.constant 0 : i32
    %46 = arith.cmpi eq, %arg1, %c0_i32_24 : i32
    %47 = arith.extui %46 : i1 to i32
    %c0_i32_25 = arith.constant 0 : i32
    %48 = arith.cmpi ne, %47, %c0_i32_25 : i32
    scf.if %48 {
      %c0_28 = arith.constant 0 : index
      %c0_29 = arith.constant 0 : index
      %54 = vector.load %arg13[%c0_28, %c0_29] : memref<8x1xf32, #tpu.memory_space<vmem>>, vector<8x1xf32>
      %cst_30 = arith.constant 0.000000e+00 : f32
      %55 = vector.broadcast %cst_30 : f32 to vector<8x1xf32>
      %56 = arith.cmpf ogt, %54, %55 : vector<8x1xf32>
      %cst_31 = arith.constant 1.000000e+00 : f32
      %57 = vector.broadcast %cst_31 : f32 to vector<8x1xf32>
      %58 = arith.select %56, %54, %57 : vector<8x1xi1>, vector<8x1xf32>
      %c0_32 = arith.constant 0 : index
      %c0_33 = arith.constant 0 : index
      %59 = vector.load %arg14[%c0_32, %c0_33] : memref<8x32xf32, #tpu.memory_space<vmem>>, vector<8x32xf32>
      %60 = tpu.reciprocal %58 {approx = true} : vector<8x1xf32> -> vector<8x1xf32>
      %61 = vector.broadcast %60 : vector<8x1xf32> to vector<8x32xf32>
      %62 = arith.mulf %59, %61 : vector<8x32xf32>
      %c0_34 = arith.constant 0 : index
      %c0_35 = arith.constant 0 : index
      %63 = vector.load %arg10[%c0_34, %c0_35] : memref<8x32xf32, #tpu.memory_space<vmem>>, vector<8x32xf32>
      tpu.vector_store %arg10[%c0_34, %c0_35], %62 {strides = array<i32>} : memref<8x32xf32, #tpu.memory_space<vmem>>, vector<8x32xf32>,
    } else {
    }
    %c0_i32_26 = arith.constant 0 : i32
    %49 = arith.cmpi eq, %arg1, %c0_i32_26 : i32
    %c2_i32 = arith.constant 2 : i32
    %50 = arith.cmpi eq, %arg0, %c2_i32 : i32
    %51 = arith.andi %49, %50 : i1
    %52 = arith.extui %51 : i1 to i32
    %c0_i32_27 = arith.constant 0 : i32
    %53 = arith.cmpi ne, %52, %c0_i32_27 : i32
    scf.if %53 {
      %c0_28 = arith.constant 0 : index
      %c0_29 = arith.constant 0 : index
      %54 = vector.load %arg8[%c0_28, %c0_29] : memref<8x32xf32, #tpu.memory_space<vmem>>, vector<8x32xf32>
      %c0_30 = arith.constant 0 : index
      %c0_31 = arith.constant 0 : index
      %55 = vector.load %arg10[%c0_30, %c0_31] : memref<8x32xf32, #tpu.memory_space<vmem>>, vector<8x32xf32>
      %56 = tpu.concatenate %54, %55 in 1 : vector<8x32xf32>, vector<8x32xf32> -> vector<8x64xf32>
      %c0_32 = arith.constant 0 : index
      %c0_33 = arith.constant 0 : index
      %57 = vector.load %arg7[%c0_32, %c0_33] : memref<8x64xf32, #tpu.memory_space<vmem>>, vector<8x64xf32>
      tpu.vector_store %arg7[%c0_32, %c0_33], %56 {strides = array<i32>} : memref<8x64xf32, #tpu.memory_space<vmem>>, vector<8x64xf32>,
    } else {
    }
    return
  }
  func.func @transform_0(%arg0: i32, %arg1: i32) -> (i32, i32) {
    %c0_i32 = arith.constant 0 : i32
    %c0_i32_0 = arith.constant 0 : i32
    %c0_i32_1 = arith.constant 0 : i32
    return %c0_i32, %c0_i32_0 : i32, i32
  }
  func.func @transform_1(%arg0: i32, %arg1: i32) -> (i32, i32) {
    %c0_i32 = arith.constant 0 : i32
    %c0_i32_0 = arith.constant 0 : i32
    %c0_i32_1 = arith.constant 0 : i32
    return %c0_i32, %c0_i32_0 : i32, i32
  }
  func.func @transform_2(%arg0: i32, %arg1: i32) -> (i32, i32) {
    %c0_i32 = arith.constant 0 : i32
    %c0_i32_0 = arith.constant 0 : i32
    %c0_i32_1 = arith.constant 0 : i32
    return %c0_i32, %c0_i32_0 : i32, i32
  }
  func.func @transform_3(%arg0: i32, %arg1: i32) -> (i32, i32) {
    %c0_i32 = arith.constant 0 : i32
    %c0_i32_0 = arith.constant 0 : i32
    %c0_i32_1 = arith.constant 0 : i32
    return %c0_i32, %c0_i32_0 : i32, i32
  }
  func.func @transform_4(%arg0: i32, %arg1: i32) -> (i32, i32) {
    %c0_i32 = arith.constant 0 : i32
    %c0_i32_0 = arith.constant 0 : i32
    %c0_i32_1 = arith.constant 0 : i32
    return %c0_i32, %c0_i32_0 : i32, i32
  }
  func.func @transform_5(%arg0: i32, %arg1: i32) -> (i32, i32) {
    %c0_i32 = arith.constant 0 : i32
    %c0_i32_0 = arith.constant 0 : i32
    %c0_i32_1 = arith.constant 0 : i32
    return %c0_i32, %c0_i32_0 : i32, i32
  }
}

module attributes {stable_mosaic.version = 11 : i64} {
  func.func @_set2set_kernel(%arg0: i32, %arg1: i32, %arg2: memref<128x32xbf16, #tpu.memory_space<vmem>>, %arg3: memref<1x128xi32, #tpu.memory_space<vmem>>, %arg4: memref<32x128xf32, #tpu.memory_space<vmem>>, %arg5: memref<32x128xf32, #tpu.memory_space<vmem>>, %arg6: memref<1x128xf32, #tpu.memory_space<vmem>>, %arg7: memref<8x64xf32, #tpu.memory_space<vmem>>, %arg8: memref<8x32xf32, #tpu.memory_space<vmem>>, %arg9: memref<8x32xf32, #tpu.memory_space<vmem>>, %arg10: memref<8x32xf32, #tpu.memory_space<vmem>>, %arg11: memref<8x32xbf16, #tpu.memory_space<vmem>>, %arg12: memref<8x1xf32, #tpu.memory_space<vmem>>, %arg13: memref<8x1xf32, #tpu.memory_space<vmem>>, %arg14: memref<8x32xf32, #tpu.memory_space<vmem>>) attributes {dimension_semantics = [#tpu.dimension_semantics<arbitrary>, #tpu.dimension_semantics<arbitrary>], iteration_bounds = array<i64: 3, 1>, scalar_prefetch = 0 : i64, scratch_operands = 7 : i64, tpu.core_type = #tpu.core_type<tc>, window_params = [{pipeline_mode = #tpu.pipeline_mode<synchronous>, transform_indices = @transform_0, window_bounds = array<i64: 128, 32>}, {pipeline_mode = #tpu.pipeline_mode<synchronous>, transform_indices = @transform_1, window_bounds = array<i64: 1, 128>}, {pipeline_mode = #tpu.pipeline_mode<synchronous>, transform_indices = @transform_2, window_bounds = array<i64: 32, 128>}, {pipeline_mode = #tpu.pipeline_mode<synchronous>, transform_indices = @transform_3, window_bounds = array<i64: 32, 128>}, {pipeline_mode = #tpu.pipeline_mode<synchronous>, transform_indices = @transform_4, window_bounds = array<i64: 1, 128>}, {pipeline_mode = #tpu.pipeline_mode<synchronous>, transform_indices = @transform_5, window_bounds = array<i64: 8, 64>}]} {
    %c0_i32 = arith.constant 0 : i32
    %0 = arith.cmpi eq, %arg0, %c0_i32 : i32
    %c0_i32_0 = arith.constant 0 : i32
    %1 = arith.cmpi eq, %arg1, %c0_i32_0 : i32
    %2 = arith.andi %0, %1 : i1
    %3 = arith.extui %2 : i1 to i32
    %c0_i32_1 = arith.constant 0 : i32
    %4 = arith.cmpi ne, %3, %c0_i32_1 : i32
    scf.if %4 {
      %cst_28 = arith.constant 0.000000e+00 : f32
      %54 = vector.broadcast %cst_28 : f32 to vector<8x32xf32>
      %c0_29 = arith.constant 0 : index
      %c0_30 = arith.constant 0 : index
      %55 = vector.load %arg8[%c0_29, %c0_30] : memref<8x32xf32, #tpu.memory_space<vmem>>, vector<8x32xf32>
      tpu.vector_store %arg8[%c0_29, %c0_30], %54 {strides = array<i32>} : memref<8x32xf32, #tpu.memory_space<vmem>>, vector<8x32xf32>,
      %cst_31 = arith.constant 0.000000e+00 : f32
      %56 = vector.broadcast %cst_31 : f32 to vector<8x32xf32>
      %c0_32 = arith.constant 0 : index
      %c0_33 = arith.constant 0 : index
      %57 = vector.load %arg9[%c0_32, %c0_33] : memref<8x32xf32, #tpu.memory_space<vmem>>, vector<8x32xf32>
      tpu.vector_store %arg9[%c0_32, %c0_33], %56 {strides = array<i32>} : memref<8x32xf32, #tpu.memory_space<vmem>>, vector<8x32xf32>,
      %cst_34 = arith.constant 0.000000e+00 : f32
      %58 = vector.broadcast %cst_34 : f32 to vector<8x32xf32>
      %c0_35 = arith.constant 0 : index
      %c0_36 = arith.constant 0 : index
      %59 = vector.load %arg10[%c0_35, %c0_36] : memref<8x32xf32, #tpu.memory_space<vmem>>, vector<8x32xf32>
      tpu.vector_store %arg10[%c0_35, %c0_36], %58 {strides = array<i32>} : memref<8x32xf32, #tpu.memory_space<vmem>>, vector<8x32xf32>,
    } else {
    }
    %c0_i32_2 = arith.constant 0 : i32
    %5 = arith.cmpi eq, %arg1, %c0_i32_2 : i32
    %6 = arith.extui %5 : i1 to i32
    %c0_i32_3 = arith.constant 0 : i32
    %7 = arith.cmpi ne, %6, %c0_i32_3 : i32
    scf.if %7 {
      %c0_28 = arith.constant 0 : index
      %c0_29 = arith.constant 0 : index
      %54 = vector.load %arg8[%c0_28, %c0_29] : memref<8x32xf32, #tpu.memory_space<vmem>>, vector<8x32xf32>
      %c0_30 = arith.constant 0 : index
      %c0_31 = arith.constant 0 : index
      %55 = vector.load %arg4[%c0_30, %c0_31] : memref<32x128xf32, #tpu.memory_space<vmem>>, vector<32x128xf32>
      %cst_32 = arith.constant dense<0.000000e+00> : vector<8x128xf32>
      %56 = tpu.matmul %54, %55, %cst_32 {dimension_numbers = #tpu.dot_dimension_numbers<[1], [0], [0], [1], [0, 0, 1, 1], [], []>} : vector<8x32xf32>, vector<32x128xf32>, vector<8x128xf32> -> vector<8x128xf32>
      %c0_33 = arith.constant 0 : index
      %c0_34 = arith.constant 0 : index
      %57 = vector.load %arg10[%c0_33, %c0_34] : memref<8x32xf32, #tpu.memory_space<vmem>>, vector<8x32xf32>
      %c0_35 = arith.constant 0 : index
      %c0_36 = arith.constant 0 : index
      %58 = vector.load %arg5[%c0_35, %c0_36] : memref<32x128xf32, #tpu.memory_space<vmem>>, vector<32x128xf32>
      %cst_37 = arith.constant dense<0.000000e+00> : vector<8x128xf32>
      %59 = tpu.matmul %57, %58, %cst_37 {dimension_numbers = #tpu.dot_dimension_numbers<[1], [0], [0], [1], [0, 0, 1, 1], [], []>} : vector<8x32xf32>, vector<32x128xf32>, vector<8x128xf32> -> vector<8x128xf32>
      %60 = arith.addf %56, %59 : vector<8x128xf32>
      %c0_38 = arith.constant 0 : index
      %c0_39 = arith.constant 0 : index
      %61 = vector.load %arg6[%c0_38, %c0_39] : memref<1x128xf32, #tpu.memory_space<vmem>>, vector<1x128xf32>
      %62 = vector.broadcast %61 : vector<1x128xf32> to vector<8x128xf32>
      %63 = arith.addf %60, %62 : vector<8x128xf32>
      %64 = vector.extract_strided_slice %63 {offsets = [0, 0], sizes = [8, 96], strides = [1, 1]} : vector<8x128xf32> to vector<8x96xf32>
      %65 = arith.negf %64 : vector<8x96xf32>
      %66 = math.exp %65 : vector<8x96xf32>
      %cst_40 = arith.constant 1.000000e+00 : f32
      %67 = vector.broadcast %cst_40 : f32 to vector<8x96xf32>
      %68 = arith.addf %67, %66 : vector<8x96xf32>
      %69 = arith.divf %67, %68 : vector<8x96xf32>
      %70 = vector.extract_strided_slice %69 {offsets = [0, 0], sizes = [8, 32], strides = [1, 1]} : vector<8x96xf32> to vector<8x32xf32>
      %71 = vector.extract_strided_slice %69 {offsets = [0, 32], sizes = [8, 32], strides = [1, 1]} : vector<8x96xf32> to vector<8x32xf32>
      %72 = vector.extract_strided_slice %69 {offsets = [0, 64], sizes = [8, 32], strides = [1, 1]} : vector<8x96xf32> to vector<8x32xf32>
      %73 = vector.extract_strided_slice %63 {offsets = [0, 96], sizes = [8, 32], strides = [1, 1]} : vector<8x128xf32> to vector<8x32xf32>
      %74 = math.tanh %73 : vector<8x32xf32>
      %c0_41 = arith.constant 0 : index
      %c0_42 = arith.constant 0 : index
      %75 = vector.load %arg9[%c0_41, %c0_42] : memref<8x32xf32, #tpu.memory_space<vmem>>, vector<8x32xf32>
      %76 = arith.mulf %71, %75 : vector<8x32xf32>
      %77 = arith.mulf %70, %74 : vector<8x32xf32>
      %78 = arith.addf %76, %77 : vector<8x32xf32>
      %c0_43 = arith.constant 0 : index
      %c0_44 = arith.constant 0 : index
      %79 = vector.load %arg9[%c0_43, %c0_44] : memref<8x32xf32, #tpu.memory_space<vmem>>, vector<8x32xf32>
      tpu.vector_store %arg9[%c0_43, %c0_44], %78 {strides = array<i32>} : memref<8x32xf32, #tpu.memory_space<vmem>>, vector<8x32xf32>,
      %80 = math.tanh %78 : vector<8x32xf32>
      %81 = arith.mulf %72, %80 : vector<8x32xf32>
      %c0_45 = arith.constant 0 : index
      %c0_46 = arith.constant 0 : index
      %82 = vector.load %arg8[%c0_45, %c0_46] : memref<8x32xf32, #tpu.memory_space<vmem>>, vector<8x32xf32>
      tpu.vector_store %arg8[%c0_45, %c0_46], %81 {strides = array<i32>} : memref<8x32xf32, #tpu.memory_space<vmem>>, vector<8x32xf32>,
      %83 = arith.truncf %81 : vector<8x32xf32> to vector<8x32xbf16>
      %c0_47 = arith.constant 0 : index
      %c0_48 = arith.constant 0 : index
      %84 = vector.load %arg11[%c0_47, %c0_48] : memref<8x32xbf16, #tpu.memory_space<vmem>>, vector<8x32xbf16>
      tpu.vector_store %arg11[%c0_47, %c0_48], %83 {strides = array<i32>} : memref<8x32xbf16, #tpu.memory_space<vmem>>, vector<8x32xbf16>,
      %cst_49 = arith.constant -1.000000e+30 : f32
      %85 = vector.broadcast %cst_49 : f32 to vector<8x1xf32>
      %c0_50 = arith.constant 0 : index
      %c0_51 = arith.constant 0 : index
      %86 = vector.load %arg12[%c0_50, %c0_51] : memref<8x1xf32, #tpu.memory_space<vmem>>, vector<8x1xf32>
      tpu.vector_store %arg12[%c0_50, %c0_51], %85 {strides = array<i32>} : memref<8x1xf32, #tpu.memory_space<vmem>>, vector<8x1xf32>,
      %cst_52 = arith.constant 0.000000e+00 : f32
      %87 = vector.broadcast %cst_52 : f32 to vector<8x1xf32>
      %c0_53 = arith.constant 0 : index
      %c0_54 = arith.constant 0 : index
      %88 = vector.load %arg13[%c0_53, %c0_54] : memref<8x1xf32, #tpu.memory_space<vmem>>, vector<8x1xf32>
      tpu.vector_store %arg13[%c0_53, %c0_54], %87 {strides = array<i32>} : memref<8x1xf32, #tpu.memory_space<vmem>>, vector<8x1xf32>,
      %cst_55 = arith.constant 0.000000e+00 : f32
      %89 = vector.broadcast %cst_55 : f32 to vector<8x32xf32>
      %c0_56 = arith.constant 0 : index
      %c0_57 = arith.constant 0 : index
      %90 = vector.load %arg14[%c0_56, %c0_57] : memref<8x32xf32, #tpu.memory_space<vmem>>, vector<8x32xf32>
      tpu.vector_store %arg14[%c0_56, %c0_57], %89 {strides = array<i32>} : memref<8x32xf32, #tpu.memory_space<vmem>>, vector<8x32xf32>,
    } else {
    }
    %c128_i32 = arith.constant 128 : i32
    %8 = arith.muli %arg1, %c128_i32 : i32
    %9 = tpu.assume_multiple %8, 128 : i32
    %10 = arith.index_cast %9 : i32 to index
    %c0 = arith.constant 0 : index
    %11 = vector.load %arg2[%10, %c0] : memref<128x32xbf16, #tpu.memory_space<vmem>>, vector<128x32xbf16>
    %c0_4 = arith.constant 0 : index
    %12 = arith.index_cast %9 : i32 to index
    %13 = vector.load %arg3[%c0_4, %12] : memref<1x128xi32, #tpu.memory_space<vmem>>, vector<1x128xi32>
    %c0_5 = arith.constant 0 : index
    %c0_6 = arith.constant 0 : index
    %14 = vector.load %arg11[%c0_5, %c0_6] : memref<8x32xbf16, #tpu.memory_space<vmem>>, vector<8x32xbf16>
    %cst = arith.constant dense<0.000000e+00> : vector<8x128xf32>
    %15 = tpu.matmul %14, %11, %cst {dimension_numbers = #tpu.dot_dimension_numbers<[1], [1], [0], [0], [0, 0, 1, 0], [], []>} : vector<8x32xbf16>, vector<128x32xbf16>, vector<8x128xf32> -> vector<8x128xf32>
    %16 = tpu.iota {dimensions = array<i32: 0>} : vector<8x128xi32>
    %17 = vector.broadcast %13 : vector<1x128xi32> to vector<8x128xi32>
    %18 = arith.cmpi eq, %16, %17 : vector<8x128xi32>
    %cst_7 = arith.constant -1.000000e+30 : f32
    %19 = vector.broadcast %cst_7 : f32 to vector<8x128xf32>
    %20 = arith.select %18, %15, %19 : vector<8x128xi1>, vector<8x128xf32>
    %c0_8 = arith.constant 0 : index
    %c0_9 = arith.constant 0 : index
    %21 = vector.load %arg12[%c0_8, %c0_9] : memref<8x1xf32, #tpu.memory_space<vmem>>, vector<8x1xf32>
    %cst_10 = arith.constant dense<0xFF800000> : vector<8xf32>
    %22 = vector.multi_reduction <maximumf>, %20, %cst_10 [1] : vector<8x128xf32> to vector<8xf32>
    %23 = vector.shape_cast %22 : vector<8xf32> to vector<8x1xf32>
    %24 = arith.maximumf %21, %23 : vector<8x1xf32>
    %25 = arith.subf %21, %24 : vector<8x1xf32>
    %26 = math.exp %25 : vector<8x1xf32>
    %27 = vector.broadcast %24 : vector<8x1xf32> to vector<8x128xf32>
    %28 = arith.subf %20, %27 : vector<8x128xf32>
    %29 = math.exp %28 : vector<8x128xf32>
    %cst_11 = arith.constant 0.000000e+00 : f32
    %30 = vector.broadcast %cst_11 : f32 to vector<8x128xf32>
    %31 = arith.select %18, %29, %30 : vector<8x128xi1>, vector<8x128xf32>
    %c0_12 = arith.constant 0 : index
    %c0_13 = arith.constant 0 : index
    %32 = vector.load %arg13[%c0_12, %c0_13] : memref<8x1xf32, #tpu.memory_space<vmem>>, vector<8x1xf32>
    %33 = arith.mulf %26, %32 : vector<8x1xf32>
    %cst_14 = arith.constant dense<0.000000e+00> : vector<8xf32>
    %34 = vector.multi_reduction <add>, %31, %cst_14 [1] : vector<8x128xf32> to vector<8xf32>
    %35 = vector.shape_cast %34 : vector<8xf32> to vector<8x1xf32>
    %36 = arith.addf %33, %35 : vector<8x1xf32>
    %c0_15 = arith.constant 0 : index
    %c0_16 = arith.constant 0 : index
    %37 = vector.load %arg13[%c0_15, %c0_16] : memref<8x1xf32, #tpu.memory_space<vmem>>, vector<8x1xf32>
    tpu.vector_store %arg13[%c0_15, %c0_16], %36 {strides = array<i32>} : memref<8x1xf32, #tpu.memory_space<vmem>>, vector<8x1xf32>,
    %c0_17 = arith.constant 0 : index
    %c0_18 = arith.constant 0 : index
    %38 = vector.load %arg14[%c0_17, %c0_18] : memref<8x32xf32, #tpu.memory_space<vmem>>, vector<8x32xf32>
    %39 = vector.broadcast %26 : vector<8x1xf32> to vector<8x32xf32>
    %40 = arith.mulf %39, %38 : vector<8x32xf32>
    %41 = arith.truncf %31 : vector<8x128xf32> to vector<8x128xbf16>
    %cst_19 = arith.constant dense<0.000000e+00> : vector<8x32xf32>
    %42 = tpu.matmul %41, %11, %cst_19 {dimension_numbers = #tpu.dot_dimension_numbers<[1], [0], [0], [1], [0, 0, 1, 1], [], []>} : vector<8x128xbf16>, vector<128x32xbf16>, vector<8x32xf32> -> vector<8x32xf32>
    %43 = arith.addf %40, %42 : vector<8x32xf32>
    %c0_20 = arith.constant 0 : index
    %c0_21 = arith.constant 0 : index
    %44 = vector.load %arg14[%c0_20, %c0_21] : memref<8x32xf32, #tpu.memory_space<vmem>>, vector<8x32xf32>
    tpu.vector_store %arg14[%c0_20, %c0_21], %43 {strides = array<i32>} : memref<8x32xf32, #tpu.memory_space<vmem>>, vector<8x32xf32>,
    %c0_22 = arith.constant 0 : index
    %c0_23 = arith.constant 0 : index
    %45 = vector.load %arg12[%c0_22, %c0_23] : memref<8x1xf32, #tpu.memory_space<vmem>>, vector<8x1xf32>
    tpu.vector_store %arg12[%c0_22, %c0_23], %24 {strides = array<i32>} : memref<8x1xf32, #tpu.memory_space<vmem>>, vector<8x1xf32>,
    %c0_i32_24 = arith.constant 0 : i32
    %46 = arith.cmpi eq, %arg1, %c0_i32_24 : i32
    %47 = arith.extui %46 : i1 to i32
    %c0_i32_25 = arith.constant 0 : i32
    %48 = arith.cmpi ne, %47, %c0_i32_25 : i32
    scf.if %48 {
      %c0_28 = arith.constant 0 : index
      %c0_29 = arith.constant 0 : index
      %54 = vector.load %arg13[%c0_28, %c0_29] : memref<8x1xf32, #tpu.memory_space<vmem>>, vector<8x1xf32>
      %cst_30 = arith.constant 0.000000e+00 : f32
      %55 = vector.broadcast %cst_30 : f32 to vector<8x1xf32>
      %56 = arith.cmpf ogt, %54, %55 : vector<8x1xf32>
      %cst_31 = arith.constant 1.000000e+00 : f32
      %57 = vector.broadcast %cst_31 : f32 to vector<8x1xf32>
      %58 = arith.select %56, %54, %57 : vector<8x1xi1>, vector<8x1xf32>
      %c0_32 = arith.constant 0 : index
      %c0_33 = arith.constant 0 : index
      %59 = vector.load %arg14[%c0_32, %c0_33] : memref<8x32xf32, #tpu.memory_space<vmem>>, vector<8x32xf32>
      %60 = tpu.reciprocal %58 {approx = true} : vector<8x1xf32> -> vector<8x1xf32>
      %61 = vector.broadcast %60 : vector<8x1xf32> to vector<8x32xf32>
      %62 = arith.mulf %59, %61 : vector<8x32xf32>
      %c0_34 = arith.constant 0 : index
      %c0_35 = arith.constant 0 : index
      %63 = vector.load %arg10[%c0_34, %c0_35] : memref<8x32xf32, #tpu.memory_space<vmem>>, vector<8x32xf32>
      tpu.vector_store %arg10[%c0_34, %c0_35], %62 {strides = array<i32>} : memref<8x32xf32, #tpu.memory_space<vmem>>, vector<8x32xf32>,
    } else {
    }
    %c0_i32_26 = arith.constant 0 : i32
    %49 = arith.cmpi eq, %arg1, %c0_i32_26 : i32
    %c2_i32 = arith.constant 2 : i32
    %50 = arith.cmpi eq, %arg0, %c2_i32 : i32
    %51 = arith.andi %49, %50 : i1
    %52 = arith.extui %51 : i1 to i32
    %c0_i32_27 = arith.constant 0 : i32
    %53 = arith.cmpi ne, %52, %c0_i32_27 : i32
    scf.if %53 {
      %c0_28 = arith.constant 0 : index
      %c0_29 = arith.constant 0 : index
      %54 = vector.load %arg8[%c0_28, %c0_29] : memref<8x32xf32, #tpu.memory_space<vmem>>, vector<8x32xf32>
      %c0_30 = arith.constant 0 : index
      %c0_31 = arith.constant 0 : index
      %55 = vector.load %arg10[%c0_30, %c0_31] : memref<8x32xf32, #tpu.memory_space<vmem>>, vector<8x32xf32>
      %56 = tpu.concatenate %54, %55 in 1 : vector<8x32xf32>, vector<8x32xf32> -> vector<8x64xf32>
      %c0_32 = arith.constant 0 : index
      %c0_33 = arith.constant 0 : index
      %57 = vector.load %arg7[%c0_32, %c0_33] : memref<8x64xf32, #tpu.memory_space<vmem>>, vector<8x64xf32>
      tpu.vector_store %arg7[%c0_32, %c0_33], %56 {strides = array<i32>} : memref<8x64xf32, #tpu.memory_space<vmem>>, vector<8x64xf32>,
    } else {
    }
    return
  }
  func.func @transform_0(%arg0: i32, %arg1: i32) -> (i32, i32) {
    %c0_i32 = arith.constant 0 : i32
    %c0_i32_0 = arith.constant 0 : i32
    %c0_i32_1 = arith.constant 0 : i32
    return %c0_i32, %c0_i32_0 : i32, i32
  }
  func.func @transform_1(%arg0: i32, %arg1: i32) -> (i32, i32) {
    %c0_i32 = arith.constant 0 : i32
    %c0_i32_0 = arith.constant 0 : i32
    %c0_i32_1 = arith.constant 0 : i32
    return %c0_i32, %c0_i32_0 : i32, i32
  }
  func.func @transform_2(%arg0: i32, %arg1: i32) -> (i32, i32) {
    %c0_i32 = arith.constant 0 : i32
    %c0_i32_0 = arith.constant 0 : i32
    %c0_i32_1 = arith.constant 0 : i32
    return %c0_i32, %c0_i32_0 : i32, i32
  }
  func.func @transform_3(%arg0: i32, %arg1: i32) -> (i32, i32) {
    %c0_i32 = arith.constant 0 : i32
    %c0_i32_0 = arith.constant 0 : i32
    %c0_i32_1 = arith.constant 0 : i32
    return %c0_i32, %c0_i32_0 : i32, i32
  }
  func.func @transform_4(%arg0: i32, %arg1: i32) -> (i32, i32) {
    %c0_i32 = arith.constant 0 : i32
    %c0_i32_0 = arith.constant 0 : i32
    %c0_i32_1 = arith.constant 0 : i32
    return %c0_i32, %c0_i32_0 : i32, i32
  }
  func.func @transform_5(%arg0: i32, %arg1: i32) -> (i32, i32) {
    %c0_i32 = arith.constant 0 : i32
    %c0_i32_0 = arith.constant 0 : i32
    %c0_i32_1 = arith.constant 0 : i32
    return %c0_i32, %c0_i32_0 : i32, i32
  }
}

</mosaic_0001>

<llo_original>
// kernel: tpu_custom_call.1
$region0: #{tpu_custom_call.1}
  #allocation0 [shape = 'u32[]', space=smem, size = 0x4, offset = 0x4, fixed_abs, tag = 'smem constant byte address 0x4 - core index']
  #allocation1 [shape = 'u32[144,128]{1,0:T(1,128)}', space=vmem, size = 0x12000, scoped, tag = 'internal scratch']
  #allocation2 [shape = 'f32[8,32]{1,0:T(8,128)}', space=vmem, size = 0x1000, scoped, tag = 'scratch operand']
  #allocation3 [shape = 'f32[8,32]{1,0:T(8,128)}', space=vmem, size = 0x1000, scoped, tag = 'scratch operand']
  #allocation4 [shape = 'f32[8,32]{1,0:T(8,128)}', space=vmem, size = 0x1000, scoped, tag = 'scratch operand']
  #allocation5 [shape = 'bf16[8,32]{1,0:T(8,128)(2,1)}', space=vmem, size = 0x800, scoped, tag = 'scratch operand']
  #allocation6 [shape = 'f32[8,1]{1,0:T(8,128)}', space=vmem, size = 0x1000, scoped, tag = 'scratch operand']
  #allocation7 [shape = 'f32[8,1]{1,0:T(8,128)}', space=vmem, size = 0x1000, scoped, tag = 'scratch operand']
  #allocation8 [shape = 'f32[8,32]{1,0:T(8,128)}', space=vmem, size = 0x1000, scoped, tag = 'scratch operand']
  %s0 = inlined_call_operand.vmem [shape: bf16[128,32], index: 0, kind: input, shape index: {}]
  %s1 = inlined_call_operand.vmem [shape: s32[1,128], index: 1, kind: input, shape index: {}]
  %s2 = inlined_call_operand.vmem [shape: f32[32,128], index: 2, kind: input, shape index: {}]
  %s3 = inlined_call_operand.vmem [shape: f32[32,128], index: 3, kind: input, shape index: {}]
  %s4 = inlined_call_operand.vmem [shape: f32[1,128], index: 4, kind: input, shape index: {}]
  %s5 = inlined_call_operand.hbm [shape: f32[8,64], index: 5, kind: output, shape index: {}]
  %s6 = sld [smem:[#allocation0]]
  $region69: #{tpu_custom_call.1} parent=0
    _
  %s8 = ssub.s32 1, %s6
  %s9 = scalar_select 0, %s8, %s6
  $region1: #{tpu_custom_call.1} parent=0
    #allocation9 [shape = 'u8[4096]{0}', space=vmem, size = 0x1000, scoped, tag = 'output window, operand 0, single buffered']
    #allocation10 [shape = 's32[2]{0}', space=sflag, size = 0x8, scoped, tag = 'scoped memory for tpu_custom_call.1']
    %10 = vsyncpa [#allocation10], 0
    loop: start=0, step=1, limit=5
    $region2: #{tpu_custom_call.1} parent=1 // loop_pre_header
      _
    $region3: #{tpu_custom_call.1} parent=1 // loop_header
      %s12 = sphi 0, %s16
      %p13 = scmp.ge.s32.totalorder %s12, 5
      %s19 = sphi 0, %s31
      %s20 = sphi 0, %s27
      %s21 = sphi 0, %s19
      %s22 = sphi 0, %s20
      %s23 = sphi 0, %s21
      %s24 = sphi 0, %s22
      %s32 = sphi 0, %s32
      %s34 = sphi 0, %s32
      %s35 = sphi 0, %s34
      %s49 = sphi 0, %s35
      %s53 = sphi 0, %s53
      %s55 = sphi 0, %s53
      %s56 = sphi 0, %s55
      %s70 = sphi 0, %s56
      %s74 = sphi 0, %s74
      %s76 = sphi 0, %s74
      %s77 = sphi 0, %s76
      %s91 = sphi 0, %s77
      %s95 = sphi 0, %s95
      %s97 = sphi 0, %s95
      %s98 = sphi 0, %s97
      %s112 = sphi 0, %s98
      %s116 = sphi 0, %s116
      %s118 = sphi 0, %s116
      %s119 = sphi 0, %s118
      %s133 = sphi 0, %s119
      %s137 = sphi 0, %s137
      %s139 = sphi 0, %s137
      %s140 = sphi 0, %s139
      %s154 = sphi 0, %s140
    $region4: #{tpu_custom_call.1} parent=1 // loop_header_branch
      %15 = sbr.rel (%p13) target = $region8
    $region5: #{tpu_custom_call.1} parent=1 // loop_body
      %s17 = ssub.s32 %s12, 1
      %s18 = ssub.s32 %s12, 2
      %s25 = sadd.s32 1, %s20
      %p26 = scmp.ge.s32.totalorder %s25, 1
      %s27 = scalar_select %p26, 0, %s25
      %s28 = sadd.s32 1, %s19
      %s29 = scalar_select %p26, %s28, %s19
      %p30 = scmp.ge.s32.totalorder %s29, 3
      %s31 = scalar_select %p30, 0, %s29
      %s33 = sadd.s32 %s32, 1
      %p36 = scmp.eq.s32.totalorder %s12, 2
      %p37 = scmp.ne.s32.totalorder %s32, %s34
      %p38 = scmp.eq.s32.totalorder %s12, 0
      %p39 = por %p37, %p38
      %p40 = scmp.ne.s32.totalorder %s32, %s34
      %p41 = scmp.eq.s32.totalorder %s17, 2
      %p42 = por %p40, %p41
      %p43 = scmp.ne.s32.totalorder %s34, %s35
      %p44 = scmp.eq.s32.totalorder %s17, 0
      %p45 = por %p43, %p44
      %p46 = scmp.ne.s32.totalorder %s34, %s35
      %p47 = scmp.eq.s32.totalorder %s18, 2
      %p48 = por %p46, %p47
      %p50 = scmp.ne.s32.totalorder %s35, %s49
      %p51 = scmp.eq.s32.totalorder %s18, 0
      %p52 = por %p50, %p51
      %s54 = sadd.s32 %s53, 1
      %p57 = scmp.eq.s32.totalorder %s12, 2
      %p58 = scmp.ne.s32.totalorder %s53, %s55
      %p59 = scmp.eq.s32.totalorder %s12, 0
      %p60 = por %p58, %p59
      %p61 = scmp.ne.s32.totalorder %s53, %s55
      %p62 = scmp.eq.s32.totalorder %s17, 2
      %p63 = por %p61, %p62
      %p64 = scmp.ne.s32.totalorder %s55, %s56
      %p65 = scmp.eq.s32.totalorder %s17, 0
      %p66 = por %p64, %p65
      %p67 = scmp.ne.s32.totalorder %s55, %s56
      %p68 = scmp.eq.s32.totalorder %s18, 2
      %p69 = por %p67, %p68
      %p71 = scmp.ne.s32.totalorder %s56, %s70
      %p72 = scmp.eq.s32.totalorder %s18, 0
      %p73 = por %p71, %p72
      %s75 = sadd.s32 %s74, 1
      %p78 = scmp.eq.s32.totalorder %s12, 2
      %p79 = scmp.ne.s32.totalorder %s74, %s76
      %p80 = scmp.eq.s32.totalorder %s12, 0
      %p81 = por %p79, %p80
      %p82 = scmp.ne.s32.totalorder %s74, %s76
      %p83 = scmp.eq.s32.totalorder %s17, 2
      %p84 = por %p82, %p83
      %p85 = scmp.ne.s32.totalorder %s76, %s77
      %p86 = scmp.eq.s32.totalorder %s17, 0
      %p87 = por %p85, %p86
      %p88 = scmp.ne.s32.totalorder %s76, %s77
      %p89 = scmp.eq.s32.totalorder %s18, 2
      %p90 = por %p88, %p89
      %p92 = scmp.ne.s32.totalorder %s77, %s91
      %p93 = scmp.eq.s32.totalorder %s18, 0
      %p94 = por %p92, %p93
      %s96 = sadd.s32 %s95, 1
      %p99 = scmp.eq.s32.totalorder %s12, 2
      %p100 = scmp.ne.s32.totalorder %s95, %s97
      %p101 = scmp.eq.s32.totalorder %s12, 0
      %p102 = por %p100, %p101
      %p103 = scmp.ne.s32.totalorder %s95, %s97
      %p104 = scmp.eq.s32.totalorder %s17, 2
      %p105 = por %p103, %p104
      %p106 = scmp.ne.s32.totalorder %s97, %s98
      %p107 = scmp.eq.s32.totalorder %s17, 0
      %p108 = por %p106, %p107
      %p109 = scmp.ne.s32.totalorder %s97, %s98
      %p110 = scmp.eq.s32.totalorder %s18, 2
      %p111 = por %p109, %p110
      %p113 = scmp.ne.s32.totalorder %s98, %s112
      %p114 = scmp.eq.s32.totalorder %s18, 0
      %p115 = por %p113, %p114
      %s117 = sadd.s32 %s116, 1
      %p120 = scmp.eq.s32.totalorder %s12, 2
      %p121 = scmp.ne.s32.totalorder %s116, %s118
      %p122 = scmp.eq.s32.totalorder %s12, 0
      %p123 = por %p121, %p122
      %p124 = scmp.ne.s32.totalorder %s116, %s118
      %p125 = scmp.eq.s32.totalorder %s17, 2
      %p126 = por %p124, %p125
      %p127 = scmp.ne.s32.totalorder %s118, %s119
      %p128 = scmp.eq.s32.totalorder %s17, 0
      %p129 = por %p127, %p128
      %p130 = scmp.ne.s32.totalorder %s118, %s119
      %p131 = scmp.eq.s32.totalorder %s18, 2
      %p132 = por %p130, %p131
      %p134 = scmp.ne.s32.totalorder %s119, %s133
      %p135 = scmp.eq.s32.totalorder %s18, 0
      %p136 = por %p134, %p135
      %s138 = sadd.s32 %s137, 1
      %p141 = scmp.eq.s32.totalorder %s12, 2
      %p142 = scmp.ne.s32.totalorder %s137, %s139
      %p143 = scmp.eq.s32.totalorder %s12, 0
      %p144 = por %p142, %p143
      %p145 = scmp.ne.s32.totalorder %s137, %s139
      %p146 = scmp.eq.s32.totalorder %s17, 2
      %p147 = por %p145, %p146
      %p148 = scmp.ne.s32.totalorder %s139, %s140
      %p149 = scmp.eq.s32.totalorder %s17, 0
      %p150 = por %p148, %p149
      %p151 = scmp.ne.s32.totalorder %s139, %s140
      %p152 = scmp.eq.s32.totalorder %s18, 2
      %p153 = por %p151, %p152
      %p155 = scmp.ne.s32.totalorder %s140, %s154
      %p156 = scmp.eq.s32.totalorder %s18, 0
      %p157 = por %p155, %p156
      %p158 = scmp.le.s32.totalorder 1, %s12
      %p159 = scmp.lt.s32.totalorder %s12, 4
      %p160 = pnand %p158, %p159
      %p161 = pneg %p160
      // Predicated region
      $region9: #{tpu_custom_call.1} parent=5 // pred_check
        _
      $region10: #{tpu_custom_call.1} parent=5 // pred_check_branch
        %163 = sbr.rel (%p160) target = $region12
      $region11: #{tpu_custom_call.1} parent=5 // pred_region
        %s164 = ssub.s32 %s12, 1
        // Predicated region
        $region13: #{tpu_custom_call.1} parent=11 // pred_check
          %p165 = pneg %p45
        $region14: #{tpu_custom_call.1} parent=11 // pred_check_branch
          %167 = sbr.rel (%p165) target = $region16
        $region15: #{tpu_custom_call.1} parent=11 // pred_region
          _
        $region16: #{tpu_custom_call.1} parent=11 // pred_fallthru
          _
        // Predicated region
        $region17: #{tpu_custom_call.1} parent=11 // pred_check
          %p168 = pneg %p66
        $region18: #{tpu_custom_call.1} parent=11 // pred_check_branch
          %170 = sbr.rel (%p168) target = $region20
        $region19: #{tpu_custom_call.1} parent=11 // pred_region
          _
        $region20: #{tpu_custom_call.1} parent=11 // pred_fallthru
          _
        // Predicated region
        $region21: #{tpu_custom_call.1} parent=11 // pred_check
          %p171 = pneg %p87
        $region22: #{tpu_custom_call.1} parent=11 // pred_check_branch
          %173 = sbr.rel (%p171) target = $region24
        $region23: #{tpu_custom_call.1} parent=11 // pred_region
          _
        $region24: #{tpu_custom_call.1} parent=11 // pred_fallthru
          _
        // Predicated region
        $region25: #{tpu_custom_call.1} parent=11 // pred_check
          %p174 = pneg %p108
        $region26: #{tpu_custom_call.1} parent=11 // pred_check_branch
          %176 = sbr.rel (%p174) target = $region28
        $region27: #{tpu_custom_call.1} parent=11 // pred_region
          _
        $region28: #{tpu_custom_call.1} parent=11 // pred_fallthru
          _
        // Predicated region
        $region29: #{tpu_custom_call.1} parent=11 // pred_check
          %p177 = pneg %p129
        $region30: #{tpu_custom_call.1} parent=11 // pred_check_branch
          %179 = sbr.rel (%p177) target = $region32
        $region31: #{tpu_custom_call.1} parent=11 // pred_region
          _
        $region32: #{tpu_custom_call.1} parent=11 // pred_fallthru
          _
      $region12: #{tpu_custom_call.1} parent=5 // pred_fallthru
        _
      %p180 = scmp.lt.s32.totalorder %s12, 3
      // Predicated region
      $region33: #{tpu_custom_call.1} parent=5 // pred_check
        %p181 = pneg %p180
      $region34: #{tpu_custom_call.1} parent=5 // pred_check_branch
        %183 = sbr.rel (%p181) target = $region36
      $region35: #{tpu_custom_call.1} parent=5 // pred_region
        _
      $region36: #{tpu_custom_call.1} parent=5 // pred_fallthru
        _
      %p184 = scmp.le.s32.totalorder 1, %s12
      %p185 = scmp.lt.s32.totalorder %s12, 4
      %p186 = pnand %p184, %p185
      %p187 = pneg %p186
      // Predicated region
      $region37: #{tpu_custom_call.1} parent=5 // pred_check
        _
      $region38: #{tpu_custom_call.1} parent=5 // pred_check_branch
        %189 = sbr.rel (%p186) target = $region40
      $region39: #{tpu_custom_call.1} parent=5 // pred_region
        %s190 = ssub.s32 %s12, 1
        %p191 = pneg %p45
        %p192 = pneg %p42
        %p193 = pneg %p66
        %p194 = pneg %p63
        %p195 = pneg %p87
        %p196 = pneg %p84
        %p197 = pneg %p108
        %p198 = pneg %p105
        %p199 = pneg %p129
        %p200 = pneg %p126
        %p201 = pneg %p150
        %p202 = pneg %p147
        %p204 = scmp.eq.s32.totalorder %s21, 0
        %p205 = scmp.eq.s32.totalorder %s22, 0
        %p206 = pnand %p204, %p205
        %p207 = pneg %p206
        // Predicated region
        $region41: #{tpu_custom_call.1} parent=39 // pred_check
          _
        $region42: #{tpu_custom_call.1} parent=39 // pred_check_branch
          %209 = sbr.rel (%p206) target = $region44
        $region43: #{tpu_custom_call.1} parent=39 // pred_region
          %vm210 = vcmask 261120
          %211 = vst.msk [vmem:[#allocation2] sm:$0xff] %vm210, 0.0
          %212 = vst.msk [vmem:[#allocation3] sm:$0xff] %vm210, 0.0
          %213 = vst.msk [vmem:[#allocation4] sm:$0xff] %vm210, 0.0
        $region44: #{tpu_custom_call.1} parent=39 // pred_fallthru
          _
        // Predicated region
        $region45: #{tpu_custom_call.1} parent=39 // pred_check
          %p214 = pneg %p205
        $region46: #{tpu_custom_call.1} parent=39 // pred_check_branch
          %216 = sbr.rel (%p214) target = $region48
        $region47: #{tpu_custom_call.1} parent=39 // pred_region
          %v217 = vld [vmem:[#allocation2] sm:$0xff]
          %v218 = vld [vmem:[%s2] sm:$0xff]
          %v219 = vld [vmem:[%s2 + $0x8] sm:$0xff]
          %v220 = vld [vmem:[%s2 + $0x10] sm:$0xff]
          %v221 = vld [vmem:[%s2 + $0x18] sm:$0xff]
          %v222 = vld [vmem:[#allocation4] sm:$0xff]
          %v223 = vld [vmem:[%s3] sm:$0xff]
          %v224 = vld [vmem:[%s3 + $0x8] sm:$0xff]
          %v225 = vld [vmem:[%s3 + $0x10] sm:$0xff]
          %v226 = vld [vmem:[%s3 + $0x18] sm:$0xff]
          %vm227 = vcmask 261120
          %v229 = vsel %vm227, %v222, 0
          %231 = vmatprep.subr.mxu0 0.0
          %232 = vmatpush1.msra.mxu0 0.0
          %233 = vmatprep.subr.mxu0 0.0
          %234 = vmatpush1.msra.mxu0 0.0
          %235 = vmatprep.subr.mxu0 0.0
          %236 = vmatpush1.msra.mxu0 0.0
          %237 = vmatprep.subr.mxu0 0.0
          %238 = vmatpush1.msra.mxu0 0.0
          %239 = vmatprep.subr.mxu0 0.0
          %240 = vmatpush1.msra.mxu0 0.0
          %241 = vmatprep.subr.mxu0 0.0
          %242 = vmatpush1.msra.mxu0 0.0
          %243 = vmatprep.subr.mxu0 0.0
          %244 = vmatpush1.msra.mxu0 0.0
          %245 = vmatprep.subr.mxu0 0.0
          %246 = vmatpush1.msra.mxu0 0.0
          %247 = vmatprep.subr.mxu0 0.0
          %248 = vmatpush1.msra.mxu0 0.0
          %249 = vmatprep.subr.mxu0 0.0
          %250 = vmatpush1.msra.mxu0 0.0
          %251 = vmatprep.subr.mxu0 0.0
          %252 = vmatpush1.msra.mxu0 0.0
          %253 = vmatprep.subr.mxu0 0.0
          %254 = vmatpush1.msra.mxu0 0.0
          %255 = vmatprep.subr.mxu0 0.0
          %256 = vmatpush1.msra.mxu0 %v226
          %257 = vmatprep.subr.mxu0 0.0
          %258 = vmatpush1.msra.mxu0 %v225
          %259 = vmatprep.subr.mxu0 0.0
          %260 = vmatpush1.msra.mxu0 %v224
          %261 = vmatprep.subr.mxu0 0.0
          %262 = vmatpush1.msra.mxu0 %v223
          %263 = vmatprep.subr.mxu0 0.0
          %264 = vmatpush2.msra.mxu0 0.0
          %265 = vmatprep.subr.mxu0 0.0
          %266 = vmatpush2.msra.mxu0 0.0
          %267 = vmatprep.subr.mxu0 0.0
          %268 = vmatpush2.msra.mxu0 0.0
          %269 = vmatprep.subr.mxu0 0.0
          %270 = vmatpush2.msra.mxu0 0.0
          %271 = vmatprep.subr.mxu0 0.0
          %272 = vmatpush2.msra.mxu0 0.0
          %273 = vmatprep.subr.mxu0 0.0
          %274 = vmatpush2.msra.mxu0 0.0
          %275 = vmatprep.subr.mxu0 0.0
          %276 = vmatpush2.msra.mxu0 0.0
          %277 = vmatprep.subr.mxu0 0.0
          %278 = vmatpush2.msra.mxu0 0.0
          %279 = vmatprep.subr.mxu0 0.0
          %280 = vmatpush2.msra.mxu0 0.0
          %281 = vmatprep.subr.mxu0 0.0
          %282 = vmatpush2.msra.mxu0 0.0
          %283 = vmatprep.subr.mxu0 0.0
          %284 = vmatpush2.msra.mxu0 0.0
          %285 = vmatprep.subr.mxu0 0.0
          %286 = vmatpush2.msra.mxu0 0.0
          %287 = vmatprep.subr.mxu0 0.0
          %288 = vmatpush2.msra.mxu0 0.0
          %289 = vmatprep.subr.mxu0 0.0
          %290 = vmatpush2.msra.mxu0 0.0
          %291 = vmatprep.subr.mxu0 0.0
          %292 = vmatpush2.msra.mxu0 0.0
          %293 = vmatprep.subr.mxu0 0.0
          %294 = vmatpush2.msra.mxu0 0.0
          %295 = vmatprep.mubr.f32.mxu0 0.0
          %296 = vmatmul.mubr.f32.gmra.mxu0 %v229
          %v297 = vpop.f32.mrf.mxu0
          %v298 = vadd.f32 0.0, %v297
          %v299 = vpop.f32.mrf.mxu0
          %300 = vdwg.mxu0
          %v302 = vsel %vm227, %v217, 0
          %304 = vmatprep.subr.mxu0 0.0
          %305 = vmatpush1.msra.mxu0 0.0
          %306 = vmatprep.subr.mxu0 0.0
          %307 = vmatpush1.msra.mxu0 0.0
          %308 = vmatprep.subr.mxu0 0.0
          %309 = vmatpush1.msra.mxu0 0.0
          %310 = vmatprep.subr.mxu0 0.0
          %311 = vmatpush1.msra.mxu0 0.0
          %312 = vmatprep.subr.mxu0 0.0
          %313 = vmatpush1.msra.mxu0 0.0
          %314 = vmatprep.subr.mxu0 0.0
          %315 = vmatpush1.msra.mxu0 0.0
          %316 = vmatprep.subr.mxu0 0.0
          %317 = vmatpush1.msra.mxu0 0.0
          %318 = vmatprep.subr.mxu0 0.0
          %319 = vmatpush1.msra.mxu0 0.0
          %320 = vmatprep.subr.mxu0 0.0
          %321 = vmatpush1.msra.mxu0 0.0
          %322 = vmatprep.subr.mxu0 0.0
          %323 = vmatpush1.msra.mxu0 0.0
          %324 = vmatprep.subr.mxu0 0.0
          %325 = vmatpush1.msra.mxu0 0.0
          %326 = vmatprep.subr.mxu0 0.0
          %327 = vmatpush1.msra.mxu0 0.0
          %328 = vmatprep.subr.mxu0 0.0
          %329 = vmatpush1.msra.mxu0 %v221
          %330 = vmatprep.subr.mxu0 0.0
          %331 = vmatpush1.msra.mxu0 %v220
          %332 = vmatprep.subr.mxu0 0.0
          %333 = vmatpush1.msra.mxu0 %v219
          %334 = vmatprep.subr.mxu0 0.0
          %335 = vmatpush1.msra.mxu0 %v218
          %336 = vmatprep.subr.mxu0 0.0
          %337 = vmatpush2.msra.mxu0 0.0
          %338 = vmatprep.subr.mxu0 0.0
          %339 = vmatpush2.msra.mxu0 0.0
          %340 = vmatprep.subr.mxu0 0.0
          %341 = vmatpush2.msra.mxu0 0.0
          %342 = vmatprep.subr.mxu0 0.0
          %343 = vmatpush2.msra.mxu0 0.0
          %344 = vmatprep.subr.mxu0 0.0
          %345 = vmatpush2.msra.mxu0 0.0
          %346 = vmatprep.subr.mxu0 0.0
          %347 = vmatpush2.msra.mxu0 0.0
          %348 = vmatprep.subr.mxu0 0.0
          %349 = vmatpush2.msra.mxu0 0.0
          %350 = vmatprep.subr.mxu0 0.0
          %351 = vmatpush2.msra.mxu0 0.0
          %352 = vmatprep.subr.mxu0 0.0
          %353 = vmatpush2.msra.mxu0 0.0
          %354 = vmatprep.subr.mxu0 0.0
          %355 = vmatpush2.msra.mxu0 0.0
          %356 = vmatprep.subr.mxu0 0.0
          %357 = vmatpush2.msra.mxu0 0.0
          %358 = vmatprep.subr.mxu0 0.0
          %359 = vmatpush2.msra.mxu0 0.0
          %360 = vmatprep.subr.mxu0 0.0
          %361 = vmatpush2.msra.mxu0 0.0
          %362 = vmatprep.subr.mxu0 0.0
          %363 = vmatpush2.msra.mxu0 0.0
          %364 = vmatprep.subr.mxu0 0.0
          %365 = vmatpush2.msra.mxu0 0.0
          %366 = vmatprep.subr.mxu0 0.0
          %367 = vmatpush2.msra.mxu0 0.0
          %368 = vmatprep.mubr.f32.mxu0 0.0
          %369 = vmatmul.mubr.f32.gmra.mxu0 %v302
          %v370 = vpop.f32.mrf.mxu0
          %v371 = vadd.f32 %v298, %v370
          %v372 = vpop.f32.mrf.mxu0
          %373 = vdwg.mxu0
          %v374 = vld [vmem:[%s4] sm:$0x1]
          %v376 = vlaneseq
          %v377 = vshrl.u32 %v376, 7
          %v378 = vsub.s32 0, %v377
          %v379 = vrot.slane %v374, %v378
          %v381 = vadd.f32 %v371, %v379
          %v382 = vxor.u32 %v381, 2147483648
          %v383 = vmul.f32 %v382, 1.442695
          %v384 = vpow.pop %v383
          %v385 = vadd.f32 %v384, 1.0
          %v386 = vrcp.pop %v385
          %v387 = vmul.f32 1.0, %v386
          %v388 = vtanh.pop %v381
          %v389 = vld [vmem:[#allocation3] sm:$0xff]
          %391 = vrot.lane.b32.xlu0 %v389, 32
          %v392 = vpop.permute.xlu0 %391
          %v394 = vmul.f32 %v387, %v392
          %396 = vrot.lane.b32.xlu0 %v388, 32
          %v397 = vpop.permute.xlu0 %396
          %v399 = vmul.f32 %v387, %v397
          %401 = vrot.lane.b32.xlu0 %v399, 32
          %v402 = vpop.permute.xlu0 %401
          %v404 = vadd.f32 %v394, %v402
          %406 = vrot.lane.b32.xlu0 %v404, 96
          %v407 = vpop.permute.xlu0 %406
          %409 = vst.msk [vmem:[#allocation3] sm:$0xff] %vm227, %v407
          %v410 = vtanh.pop %v404
          %412 = vrot.lane.b32.xlu0 %v410, 32
          %v413 = vpop.permute.xlu0 %412
          %v415 = vmul.f32 %v387, %v413
          %417 = vrot.lane.b32.xlu0 %v415, 64
          %v418 = vpop.permute.xlu0 %417
          %420 = vst.msk [vmem:[#allocation2] sm:$0xff] %vm227, %v418
          %v421 = vpack.c.bf16 %v415, %v415
          %v423 = vunpack.c.l.b16 %v421
          %v424 = vpack.c.b16 %v423, %v423
          %425 = vrot.lane.b32.xlu0 %v424, 64
          %v426 = vpop.permute.xlu0 %425
          %vm428 = vcmask 257024
          %429 = vst.msk [vmem:[#allocation5] sm:$0xf] %vm428, %v426
          %vm430 = vcmask 7168
          %431 = vst.msk [vmem:[#allocation6] sm:$0xff] %vm430, -1e+30
          %432 = vst.msk [vmem:[#allocation7] sm:$0xff] %vm430, 0.0
          %433 = vst.msk [vmem:[#allocation8] sm:$0xff] %vm227, 0.0
        $region48: #{tpu_custom_call.1} parent=39 // pred_fallthru
          _
        %s434 = smul.u32 %s22, 128
        %s435 = sshra.s32 %s434, 3
        %s436 = sand.u32 %s434, 7
        %s437 = smul.addr %s435, 4
        %s438 = scalar_lea.vmem %s0, %s437
        %v439 = vld [vmem:[%s438] sm:$0xf]
        %v440 = vld [vmem:[%s438 + $0x4] sm:$0xf]
        %v441 = vld [vmem:[%s438 + $0x8] sm:$0xf]
        %v442 = vld [vmem:[%s438 + $0xc] sm:$0xf]
        %v443 = vld [vmem:[%s438 + $0x10] sm:$0xf]
        %v444 = vld [vmem:[%s438 + $0x14] sm:$0xf]
        %v445 = vld [vmem:[%s438 + $0x18] sm:$0xf]
        %v446 = vld [vmem:[%s438 + $0x1c] sm:$0xf]
        %v447 = vld [vmem:[%s438 + $0x20] sm:$0xf]
        %v448 = vld [vmem:[%s438 + $0x24] sm:$0xf]
        %v449 = vld [vmem:[%s438 + $0x28] sm:$0xf]
        %v450 = vld [vmem:[%s438 + $0x2c] sm:$0xf]
        %v451 = vld [vmem:[%s438 + $0x30] sm:$0xf]
        %v452 = vld [vmem:[%s438 + $0x34] sm:$0xf]
        %v453 = vld [vmem:[%s438 + $0x38] sm:$0xf]
        %v454 = vld [vmem:[%s438 + $0x3c] sm:$0xf]
        %s455 = sshra.s32 %s434, 7
        %s456 = sand.u32 %s434, 127
        %s457 = scalar_lea.vmem %s1, %s455
        %v458 = vld [vmem:[%s457] sm:$0x1]
        %v459 = vld [vmem:[#allocation5] sm:$0xf]
        %v476 = vunpack.c.l.b16 %v439
        %v477 = vunpack.c.l.b16 %v440
        %v478 = vunpack.c.l.b16 %v441
        %v479 = vunpack.c.l.b16 %v442
        %v480 = vunpack.c.l.b16 %v443
        %v481 = vunpack.c.l.b16 %v444
        %v482 = vunpack.c.l.b16 %v445
        %v483 = vunpack.c.l.b16 %v446
        %v484 = vunpack.c.l.b16 %v447
        %v485 = vunpack.c.l.b16 %v448
        %v486 = vunpack.c.l.b16 %v449
        %v487 = vunpack.c.l.b16 %v450
        %v488 = vunpack.c.l.b16 %v451
        %v489 = vunpack.c.l.b16 %v452
        %v490 = vunpack.c.l.b16 %v453
        %v491 = vunpack.c.l.b16 %v454
        %v492 = vpack.c.b16 %v477, %v476
        %v493 = vpack.c.b16 %v479, %v478
        %v494 = vpack.c.b16 %v481, %v480
        %v495 = vpack.c.b16 %v483, %v482
        %v496 = vpack.c.b16 %v485, %v484
        %v497 = vpack.c.b16 %v487, %v486
        %v498 = vpack.c.b16 %v489, %v488
        %v499 = vpack.c.b16 %v491, %v490
        %vm500 = vcmask 261120
        %v502 = vsel %vm500, %v459, 0
        %v505 = vsel %vm500, %v492, 0
        %v508 = vsel %vm500, %v493, 0
        %v511 = vsel %vm500, %v494, 0
        %v514 = vsel %vm500, %v495, 0
        %v517 = vsel %vm500, %v496, 0
        %v520 = vsel %vm500, %v497, 0
        %v523 = vsel %vm500, %v498, 0
        %v526 = vsel %vm500, %v499, 0
        %528 = vmatprep.subr.bf16.mxu0 0
        %529 = vmatpush1.bf16.xpose.msra.mxu0 %v526
        %530 = vmatprep.subr.bf16.mxu0 0
        %531 = vmatpush1.bf16.xpose.msra.mxu0 %v523
        %532 = vmatprep.subr.bf16.mxu0 0
        %533 = vmatpush1.bf16.xpose.msra.mxu0 %v520
        %534 = vmatprep.subr.bf16.mxu0 0
        %535 = vmatpush1.bf16.xpose.msra.mxu0 %v517
        %536 = vmatprep.subr.bf16.mxu0 0
        %537 = vmatpush1.bf16.xpose.msra.mxu0 %v514
        %538 = vmatprep.subr.bf16.mxu0 0
        %539 = vmatpush1.bf16.xpose.msra.mxu0 %v511
        %540 = vmatprep.subr.bf16.mxu0 0
        %541 = vmatpush1.bf16.xpose.msra.mxu0 %v508
        %542 = vmatprep.subr.bf16.mxu0 0
        %543 = vmatpush1.bf16.xpose.msra.mxu0 %v505
        %544 = vmatprep.subr.bf16.mxu0 0
        %545 = vmatpush2.bf16.xpose.msra.mxu0 0
        %546 = vmatprep.subr.bf16.mxu0 0
        %547 = vmatpush2.bf16.xpose.msra.mxu0 0
        %548 = vmatprep.subr.bf16.mxu0 0
        %549 = vmatpush2.bf16.xpose.msra.mxu0 0
        %550 = vmatprep.subr.bf16.mxu0 0
        %551 = vmatpush2.bf16.xpose.msra.mxu0 0
        %552 = vmatprep.subr.bf16.mxu0 0
        %553 = vmatpush2.bf16.xpose.msra.mxu0 0
        %554 = vmatprep.subr.bf16.mxu0 0
        %555 = vmatpush2.bf16.xpose.msra.mxu0 0
        %556 = vmatprep.subr.bf16.mxu0 0
        %557 = vmatpush2.bf16.xpose.msra.mxu0 0
        %558 = vmatprep.subr.bf16.mxu0 0
        %559 = vmatpush2.bf16.xpose.msra.mxu0 0
        %560 = vmatprep.mubr.bf16.mxu0 0
        %561 = vmatmul.mubr.bf16.gmra.mxu0 %v502
        %v562 = vpop.f32.mrf.mxu0
        %v563 = vadd.f32 0.0, %v562
        %v564 = vpop.f32.mrf.mxu0
        %v565 = vpop.f32.mrf.mxu0
        %v566 = vpop.f32.mrf.mxu0
        %567 = vdwg.mxu0
        %v568 = vlaneseq
        %v569 = vshrl.u32 %v568, 7
        %v570 = vlaneseq
        %v571 = vshrl.u32 %v570, 7
        %v572 = vsub.s32 0, %v571
        %v573 = vrot.slane %v458, %v572
        %vm574 = vcmp.eq.s32.totalorder %v569, %v573
        %v575 = vsel %vm574, %v563, -1e+30
        %v576 = vld [vmem:[#allocation6] sm:$0xff]
        %577 = vmax.xlane.f32.xlu0 %v575
        %v578 = vpop.xlane.xlu0 %577
        %v579 = vmax.f32 %v576, %v578
        %v580 = vsub.f32 %v576, %v579
        %v581 = vmul.f32 %v580, 1.442695
        %v582 = vpow.pop %v581
        %584 = vset.pattern.permute.xlu0 0
        %585 = vperm.xlu0 %584, %v579
        %v586 = vpop.permute.xlu0 %585
        %v588 = vsub.f32 %v575, %v586
        %v589 = vmul.f32 %v588, 1.442695
        %v590 = vpow.pop %v589
        %v591 = vsel %vm574, %v590, 0.0
        %v592 = vld [vmem:[#allocation7] sm:$0xff]
        %v593 = vmul.f32 %v582, %v592
        %594 = vadd.xlane.f32.xlu0 %v591
        %v595 = vpop.xlane.xlu0 %594
        %v596 = vadd.f32 %v593, %v595
        %vm597 = vcmask 7168
        %598 = vst.msk [vmem:[#allocation7] sm:$0xff] %vm597, %v596
        %v599 = vld [vmem:[#allocation8] sm:$0xff]
        %601 = vset.pattern.permute.xlu0 0
        %602 = vperm.xlu0 %601, %v582
        %v603 = vpop.permute.xlu0 %602
        %v605 = vmul.f32 %v603, %v599
        %v606 = vpack.c.bf16 %v591, %v591
        %615 = vmatprep.subr.bf16.mxu0 0
        %616 = vmatpush1.bf16.msra.mxu0 %v499
        %617 = vmatprep.subr.bf16.mxu0 0
        %618 = vmatpush1.bf16.msra.mxu0 %v498
        %619 = vmatprep.subr.bf16.mxu0 0
        %620 = vmatpush1.bf16.msra.mxu0 %v497
        %621 = vmatprep.subr.bf16.mxu0 0
        %622 = vmatpush1.bf16.msra.mxu0 %v496
        %623 = vmatprep.subr.bf16.mxu0 0
        %624 = vmatpush1.bf16.msra.mxu0 %v495
        %625 = vmatprep.subr.bf16.mxu0 0
        %626 = vmatpush1.bf16.msra.mxu0 %v494
        %627 = vmatprep.subr.bf16.mxu0 0
        %628 = vmatpush1.bf16.msra.mxu0 %v493
        %629 = vmatprep.subr.bf16.mxu0 0
        %630 = vmatpush1.bf16.msra.mxu0 %v492
        %631 = vmatprep.subr.bf16.mxu0 0
        %632 = vmatpush2.bf16.msra.mxu0 0
        %633 = vmatprep.subr.bf16.mxu0 0
        %634 = vmatpush2.bf16.msra.mxu0 0
        %635 = vmatprep.subr.bf16.mxu0 0
        %636 = vmatpush2.bf16.msra.mxu0 0
        %637 = vmatprep.subr.bf16.mxu0 0
        %638 = vmatpush2.bf16.msra.mxu0 0
        %639 = vmatprep.subr.bf16.mxu0 0
        %640 = vmatpush2.bf16.msra.mxu0 0
        %641 = vmatprep.subr.bf16.mxu0 0
        %642 = vmatpush2.bf16.msra.mxu0 0
        %643 = vmatprep.subr.bf16.mxu0 0
        %644 = vmatpush2.bf16.msra.mxu0 0
        %645 = vmatprep.subr.bf16.mxu0 0
        %646 = vmatpush2.bf16.msra.mxu0 0
        %647 = vmatprep.mubr.bf16.mxu0 0
        %648 = vmatmul.mubr.bf16.gmra.mxu0 %v606
        %v649 = vpop.f32.mrf.mxu0
        %v650 = vadd.f32 0.0, %v649
        %v651 = vpop.f32.mrf.mxu0
        %v652 = vpop.f32.mrf.mxu0
        %v653 = vpop.f32.mrf.mxu0
        %654 = vdwg.mxu0
        %v655 = vadd.f32 %v605, %v650
        %656 = vst.msk [vmem:[#allocation8] sm:$0xff] %vm500, %v655
        %657 = vst.msk [vmem:[#allocation6] sm:$0xff] %vm597, %v579
        // Predicated region
        $region49: #{tpu_custom_call.1} parent=39 // pred_check
          %p658 = pneg %p205
        $region50: #{tpu_custom_call.1} parent=39 // pred_check_branch
          %660 = sbr.rel (%p658) target = $region52
        $region51: #{tpu_custom_call.1} parent=39 // pred_region
          %v661 = vld [vmem:[#allocation7] sm:$0xff]
          %vm662 = vcmp.gt.f32.partialorder %v661, 0.0
          %v663 = vsel %vm662, %v661, 1.0
          %v664 = vld [vmem:[#allocation8] sm:$0xff]
          %v665 = vrcp.pop %v663
          %667 = vset.pattern.permute.xlu0 0
          %668 = vperm.xlu0 %667, %v665
          %v669 = vpop.permute.xlu0 %668
          %v671 = vmul.f32 %v664, %v669
          %672 = vst.msk [vmem:[#allocation4] sm:$0xff] %vm500, %v671
        $region52: #{tpu_custom_call.1} parent=39 // pred_fallthru
          _
        %p673 = scmp.eq.s32.totalorder %s21, 2
        %p674 = pnand %p205, %p673
        %p675 = pneg %p674
        // Predicated region
        $region53: #{tpu_custom_call.1} parent=39 // pred_check
          _
        $region54: #{tpu_custom_call.1} parent=39 // pred_check_branch
          %677 = sbr.rel (%p674) target = $region56
        $region55: #{tpu_custom_call.1} parent=39 // pred_region
          %v678 = vld [vmem:[#allocation2] sm:$0xff]
          %v679 = vld [vmem:[#allocation4] sm:$0xff]
          %681 = vrot.lane.b32.xlu0 %v679, 32
          %v682 = vpop.permute.xlu0 %681
          %v684 = vsel %vm500, %v678, %v682
          %vm685 = vcmask 523264
          %686 = vst.msk [vmem:[#allocation9] sm:$0xff] %vm685, %v684
        $region56: #{tpu_custom_call.1} parent=39 // pred_fallthru
          _
        // Predicated region
        $region57: #{tpu_custom_call.1} parent=39 // pred_check
          %p687 = pneg %p147
        $region58: #{tpu_custom_call.1} parent=39 // pred_check_branch
          %689 = sbr.rel (%p687) target = $region60
        $region59: #{tpu_custom_call.1} parent=39 // pred_region
          %s691 = ssub.s32 128, 128
          %692 = vsyncadd [#allocation10], %s691
          %s694 = sshll.u32 [#allocation9], 4
          %s695 = int_to_ptr.vmem [resolvable:$true] %s694
          %697 = dma.vmem_to_hbm [thread:$0]  %s695, 128, %s5, [#allocation10]
        $region60: #{tpu_custom_call.1} parent=39 // pred_fallthru
          _
        // Predicated region
        $region61: #{tpu_custom_call.1} parent=39 // pred_check
          %p698 = pneg %p147
        $region62: #{tpu_custom_call.1} parent=39 // pred_check_branch
          %700 = sbr.rel (%p698) target = $region64
        $region63: #{tpu_custom_call.1} parent=39 // pred_region
          %701 = dma.done [#allocation10], 128
        $region64: #{tpu_custom_call.1} parent=39 // pred_fallthru
          _
      $region40: #{tpu_custom_call.1} parent=5 // pred_fallthru
        _
      %p702 = scmp.le.s32.totalorder 2, %s12
      // Predicated region
      $region65: #{tpu_custom_call.1} parent=5 // pred_check
        %p703 = pneg %p702
      $region66: #{tpu_custom_call.1} parent=5 // pred_check_branch
        %705 = sbr.rel (%p703) target = $region68
      $region67: #{tpu_custom_call.1} parent=5 // pred_region
        %s706 = ssub.s32 %s12, 2
      $region68: #{tpu_custom_call.1} parent=5 // pred_fallthru
        _
    $region6: #{tpu_custom_call.1} parent=1 // loop_footer
      %s16 = sadd.s32 1, %s12
    $region7: #{tpu_custom_call.1} parent=1 // loop_footer_branch
      %11 = sbr.rel target = $region3
    $region8: #{tpu_custom_call.1} parent=1 // loop_exit
      _
    %707 = vsyncpa [#allocation10], 1
    %s708 = scalar_lea.sflag [#allocation10], 1
    %709 = vsyncpa %s708, 1

// kernel: tpu_custom_call.1
$region0: #{tpu_custom_call.1}
  #allocation0 [shape = 'u32[]', space=smem, size = 0x4, offset = 0x4, fixed_abs, tag = 'smem constant byte address 0x4 - core index']
  #allocation1 [shape = 'u32[144,128]{1,0:T(1,128)}', space=vmem, size = 0x12000, scoped, tag = 'internal scratch']
  #allocation2 [shape = 'f32[8,32]{1,0:T(8,128)}', space=vmem, size = 0x1000, scoped, tag = 'scratch operand']
  #allocation3 [shape = 'f32[8,32]{1,0:T(8,128)}', space=vmem, size = 0x1000, scoped, tag = 'scratch operand']
  #allocation4 [shape = 'f32[8,32]{1,0:T(8,128)}', space=vmem, size = 0x1000, scoped, tag = 'scratch operand']
  #allocation5 [shape = 'bf16[8,32]{1,0:T(8,128)(2,1)}', space=vmem, size = 0x800, scoped, tag = 'scratch operand']
  #allocation6 [shape = 'f32[8,1]{1,0:T(8,128)}', space=vmem, size = 0x1000, scoped, tag = 'scratch operand']
  #allocation7 [shape = 'f32[8,1]{1,0:T(8,128)}', space=vmem, size = 0x1000, scoped, tag = 'scratch operand']
  #allocation8 [shape = 'f32[8,32]{1,0:T(8,128)}', space=vmem, size = 0x1000, scoped, tag = 'scratch operand']
  %s0 = inlined_call_operand.vmem [shape: bf16[128,32], index: 0, kind: input, shape index: {}]
  %s1 = inlined_call_operand.vmem [shape: s32[1,128], index: 1, kind: input, shape index: {}]
  %s2 = inlined_call_operand.vmem [shape: f32[32,128], index: 2, kind: input, shape index: {}]
  %s3 = inlined_call_operand.vmem [shape: f32[32,128], index: 3, kind: input, shape index: {}]
  %s4 = inlined_call_operand.vmem [shape: f32[1,128], index: 4, kind: input, shape index: {}]
  %s5 = inlined_call_operand.hbm [shape: f32[8,64], index: 5, kind: output, shape index: {}]
  %s6 = sld [smem:[#allocation0]]
  $region69: #{tpu_custom_call.1} parent=0
    _
  %s8 = ssub.s32 1, %s6
  %s9 = scalar_select 0, %s8, %s6
  $region1: #{tpu_custom_call.1} parent=0
    #allocation9 [shape = 'u8[4096]{0}', space=vmem, size = 0x1000, scoped, tag = 'output window, operand 0, single buffered']
    #allocation10 [shape = 's32[2]{0}', space=sflag, size = 0x8, scoped, tag = 'scoped memory for tpu_custom_call.1']
    %10 = vsyncpa [#allocation10], 0
    loop: start=0, step=1, limit=5
    $region2: #{tpu_custom_call.1} parent=1 // loop_pre_header
      _
    $region3: #{tpu_custom_call.1} parent=1 // loop_header
      %s12 = sphi 0, %s16
      %p13 = scmp.ge.s32.totalorder %s12, 5
      %s19 = sphi 0, %s31
      %s20 = sphi 0, %s27
      %s21 = sphi 0, %s19
      %s22 = sphi 0, %s20
      %s23 = sphi 0, %s21
      %s24 = sphi 0, %s22
      %s32 = sphi 0, %s32
      %s34 = sphi 0, %s32
      %s35 = sphi 0, %s34
      %s49 = sphi 0, %s35
      %s53 = sphi 0, %s53
      %s55 = sphi 0, %s53
      %s56 = sphi 0, %s55
      %s70 = sphi 0, %s56
      %s74 = sphi 0, %s74
      %s76 = sphi 0, %s74
      %s77 = sphi 0, %s76
      %s91 = sphi 0, %s77
      %s95 = sphi 0, %s95
      %s97 = sphi 0, %s95
      %s98 = sphi 0, %s97
      %s112 = sphi 0, %s98
      %s116 = sphi 0, %s116
      %s118 = sphi 0, %s116
      %s119 = sphi 0, %s118
      %s133 = sphi 0, %s119
      %s137 = sphi 0, %s137
      %s139 = sphi 0, %s137
      %s140 = sphi 0, %s139
      %s154 = sphi 0, %s140
    $region4: #{tpu_custom_call.1} parent=1 // loop_header_branch
      %15 = sbr.rel (%p13) target = $region8
    $region5: #{tpu_custom_call.1} parent=1 // loop_body
      %s17 = ssub.s32 %s12, 1
      %s18 = ssub.s32 %s12, 2
      %s25 = sadd.s32 1, %s20
      %p26 = scmp.ge.s32.totalorder %s25, 1
      %s27 = scalar_select %p26, 0, %s25
      %s28 = sadd.s32 1, %s19
      %s29 = scalar_select %p26, %s28, %s19
      %p30 = scmp.ge.s32.totalorder %s29, 3
      %s31 = scalar_select %p30, 0, %s29
      %s33 = sadd.s32 %s32, 1
      %p36 = scmp.eq.s32.totalorder %s12, 2
      %p37 = scmp.ne.s32.totalorder %s32, %s34
      %p38 = scmp.eq.s32.totalorder %s12, 0
      %p39 = por %p37, %p38
      %p40 = scmp.ne.s32.totalorder %s32, %s34
      %p41 = scmp.eq.s32.totalorder %s17, 2
      %p42 = por %p40, %p41
      %p43 = scmp.ne.s32.totalorder %s34, %s35
      %p44 = scmp.eq.s32.totalorder %s17, 0
      %p45 = por %p43, %p44
      %p46 = scmp.ne.s32.totalorder %s34, %s35
      %p47 = scmp.eq.s32.totalorder %s18, 2
      %p48 = por %p46, %p47
      %p50 = scmp.ne.s32.totalorder %s35, %s49
      %p51 = scmp.eq.s32.totalorder %s18, 0
      %p52 = por %p50, %p51
      %s54 = sadd.s32 %s53, 1
      %p57 = scmp.eq.s32.totalorder %s12, 2
      %p58 = scmp.ne.s32.totalorder %s53, %s55
      %p59 = scmp.eq.s32.totalorder %s12, 0
      %p60 = por %p58, %p59
      %p61 = scmp.ne.s32.totalorder %s53, %s55
      %p62 = scmp.eq.s32.totalorder %s17, 2
      %p63 = por %p61, %p62
      %p64 = scmp.ne.s32.totalorder %s55, %s56
      %p65 = scmp.eq.s32.totalorder %s17, 0
      %p66 = por %p64, %p65
      %p67 = scmp.ne.s32.totalorder %s55, %s56
      %p68 = scmp.eq.s32.totalorder %s18, 2
      %p69 = por %p67, %p68
      %p71 = scmp.ne.s32.totalorder %s56, %s70
      %p72 = scmp.eq.s32.totalorder %s18, 0
      %p73 = por %p71, %p72
      %s75 = sadd.s32 %s74, 1
      %p78 = scmp.eq.s32.totalorder %s12, 2
      %p79 = scmp.ne.s32.totalorder %s74, %s76
      %p80 = scmp.eq.s32.totalorder %s12, 0
      %p81 = por %p79, %p80
      %p82 = scmp.ne.s32.totalorder %s74, %s76
      %p83 = scmp.eq.s32.totalorder %s17, 2
      %p84 = por %p82, %p83
      %p85 = scmp.ne.s32.totalorder %s76, %s77
      %p86 = scmp.eq.s32.totalorder %s17, 0
      %p87 = por %p85, %p86
      %p88 = scmp.ne.s32.totalorder %s76, %s77
      %p89 = scmp.eq.s32.totalorder %s18, 2
      %p90 = por %p88, %p89
      %p92 = scmp.ne.s32.totalorder %s77, %s91
      %p93 = scmp.eq.s32.totalorder %s18, 0
      %p94 = por %p92, %p93
      %s96 = sadd.s32 %s95, 1
      %p99 = scmp.eq.s32.totalorder %s12, 2
      %p100 = scmp.ne.s32.totalorder %s95, %s97
      %p101 = scmp.eq.s32.totalorder %s12, 0
      %p102 = por %p100, %p101
      %p103 = scmp.ne.s32.totalorder %s95, %s97
      %p104 = scmp.eq.s32.totalorder %s17, 2
      %p105 = por %p103, %p104
      %p106 = scmp.ne.s32.totalorder %s97, %s98
      %p107 = scmp.eq.s32.totalorder %s17, 0
      %p108 = por %p106, %p107
      %p109 = scmp.ne.s32.totalorder %s97, %s98
      %p110 = scmp.eq.s32.totalorder %s18, 2
      %p111 = por %p109, %p110
      %p113 = scmp.ne.s32.totalorder %s98, %s112
      %p114 = scmp.eq.s32.totalorder %s18, 0
      %p115 = por %p113, %p114
      %s117 = sadd.s32 %s116, 1
      %p120 = scmp.eq.s32.totalorder %s12, 2
      %p121 = scmp.ne.s32.totalorder %s116, %s118
      %p122 = scmp.eq.s32.totalorder %s12, 0
      %p123 = por %p121, %p122
      %p124 = scmp.ne.s32.totalorder %s116, %s118
      %p125 = scmp.eq.s32.totalorder %s17, 2
      %p126 = por %p124, %p125
      %p127 = scmp.ne.s32.totalorder %s118, %s119
      %p128 = scmp.eq.s32.totalorder %s17, 0
      %p129 = por %p127, %p128
      %p130 = scmp.ne.s32.totalorder %s118, %s119
      %p131 = scmp.eq.s32.totalorder %s18, 2
      %p132 = por %p130, %p131
      %p134 = scmp.ne.s32.totalorder %s119, %s133
      %p135 = scmp.eq.s32.totalorder %s18, 0
      %p136 = por %p134, %p135
      %s138 = sadd.s32 %s137, 1
      %p141 = scmp.eq.s32.totalorder %s12, 2
      %p142 = scmp.ne.s32.totalorder %s137, %s139
      %p143 = scmp.eq.s32.totalorder %s12, 0
      %p144 = por %p142, %p143
      %p145 = scmp.ne.s32.totalorder %s137, %s139
      %p146 = scmp.eq.s32.totalorder %s17, 2
      %p147 = por %p145, %p146
      %p148 = scmp.ne.s32.totalorder %s139, %s140
      %p149 = scmp.eq.s32.totalorder %s17, 0
      %p150 = por %p148, %p149
      %p151 = scmp.ne.s32.totalorder %s139, %s140
      %p152 = scmp.eq.s32.totalorder %s18, 2
      %p153 = por %p151, %p152
      %p155 = scmp.ne.s32.totalorder %s140, %s154
      %p156 = scmp.eq.s32.totalorder %s18, 0
      %p157 = por %p155, %p156
      %p158 = scmp.le.s32.totalorder 1, %s12
      %p159 = scmp.lt.s32.totalorder %s12, 4
      %p160 = pnand %p158, %p159
      %p161 = pneg %p160
      // Predicated region
      $region9: #{tpu_custom_call.1} parent=5 // pred_check
        _
      $region10: #{tpu_custom_call.1} parent=5 // pred_check_branch
        %163 = sbr.rel (%p160) target = $region12
      $region11: #{tpu_custom_call.1} parent=5 // pred_region
        %s164 = ssub.s32 %s12, 1
        // Predicated region
        $region13: #{tpu_custom_call.1} parent=11 // pred_check
          %p165 = pneg %p45
        $region14: #{tpu_custom_call.1} parent=11 // pred_check_branch
          %167 = sbr.rel (%p165) target = $region16
        $region15: #{tpu_custom_call.1} parent=11 // pred_region
          _
        $region16: #{tpu_custom_call.1} parent=11 // pred_fallthru
          _
        // Predicated region
        $region17: #{tpu_custom_call.1} parent=11 // pred_check
          %p168 = pneg %p66
        $region18: #{tpu_custom_call.1} parent=11 // pred_check_branch
          %170 = sbr.rel (%p168) target = $region20
        $region19: #{tpu_custom_call.1} parent=11 // pred_region
          _
        $region20: #{tpu_custom_call.1} parent=11 // pred_fallthru
          _
        // Predicated region
        $region21: #{tpu_custom_call.1} parent=11 // pred_check
          %p171 = pneg %p87
        $region22: #{tpu_custom_call.1} parent=11 // pred_check_branch
          %173 = sbr.rel (%p171) target = $region24
        $region23: #{tpu_custom_call.1} parent=11 // pred_region
          _
        $region24: #{tpu_custom_call.1} parent=11 // pred_fallthru
          _
        // Predicated region
        $region25: #{tpu_custom_call.1} parent=11 // pred_check
          %p174 = pneg %p108
        $region26: #{tpu_custom_call.1} parent=11 // pred_check_branch
          %176 = sbr.rel (%p174) target = $region28
        $region27: #{tpu_custom_call.1} parent=11 // pred_region
          _
        $region28: #{tpu_custom_call.1} parent=11 // pred_fallthru
          _
        // Predicated region
        $region29: #{tpu_custom_call.1} parent=11 // pred_check
          %p177 = pneg %p129
        $region30: #{tpu_custom_call.1} parent=11 // pred_check_branch
          %179 = sbr.rel (%p177) target = $region32
        $region31: #{tpu_custom_call.1} parent=11 // pred_region
          _
        $region32: #{tpu_custom_call.1} parent=11 // pred_fallthru
          _
      $region12: #{tpu_custom_call.1} parent=5 // pred_fallthru
        _
      %p180 = scmp.lt.s32.totalorder %s12, 3
      // Predicated region
      $region33: #{tpu_custom_call.1} parent=5 // pred_check
        %p181 = pneg %p180
      $region34: #{tpu_custom_call.1} parent=5 // pred_check_branch
        %183 = sbr.rel (%p181) target = $region36
      $region35: #{tpu_custom_call.1} parent=5 // pred_region
        _
      $region36: #{tpu_custom_call.1} parent=5 // pred_fallthru
        _
      %p184 = scmp.le.s32.totalorder 1, %s12
      %p185 = scmp.lt.s32.totalorder %s12, 4
      %p186 = pnand %p184, %p185
      %p187 = pneg %p186
      // Predicated region
      $region37: #{tpu_custom_call.1} parent=5 // pred_check
        _
      $region38: #{tpu_custom_call.1} parent=5 // pred_check_branch
        %189 = sbr.rel (%p186) target = $region40
      $region39: #{tpu_custom_call.1} parent=5 // pred_region
        %s190 = ssub.s32 %s12, 1
        %p191 = pneg %p45
        %p192 = pneg %p42
        %p193 = pneg %p66
        %p194 = pneg %p63
        %p195 = pneg %p87
        %p196 = pneg %p84
        %p197 = pneg %p108
        %p198 = pneg %p105
        %p199 = pneg %p129
        %p200 = pneg %p126
        %p201 = pneg %p150
        %p202 = pneg %p147
        %p204 = scmp.eq.s32.totalorder %s21, 0
        %p205 = scmp.eq.s32.totalorder %s22, 0
        %p206 = pnand %p204, %p205
        %p207 = pneg %p206
        // Predicated region
        $region41: #{tpu_custom_call.1} parent=39 // pred_check
          _
        $region42: #{tpu_custom_call.1} parent=39 // pred_check_branch
          %209 = sbr.rel (%p206) target = $region44
        $region43: #{tpu_custom_call.1} parent=39 // pred_region
          %vm210 = vcmask 261120
          %211 = vst.msk [vmem:[#allocation2] sm:$0xff] %vm210, 0.0
          %212 = vst.msk [vmem:[#allocation3] sm:$0xff] %vm210, 0.0
          %213 = vst.msk [vmem:[#allocation4] sm:$0xff] %vm210, 0.0
        $region44: #{tpu_custom_call.1} parent=39 // pred_fallthru
          _
        // Predicated region
        $region45: #{tpu_custom_call.1} parent=39 // pred_check
          %p214 = pneg %p205
        $region46: #{tpu_custom_call.1} parent=39 // pred_check_branch
          %216 = sbr.rel (%p214) target = $region48
        $region47: #{tpu_custom_call.1} parent=39 // pred_region
          %v217 = vld [vmem:[#allocation2] sm:$0xff]
          %v218 = vld [vmem:[%s2] sm:$0xff]
          %v219 = vld [vmem:[%s2 + $0x8] sm:$0xff]
          %v220 = vld [vmem:[%s2 + $0x10] sm:$0xff]
          %v221 = vld [vmem:[%s2 + $0x18] sm:$0xff]
          %v222 = vld [vmem:[#allocation4] sm:$0xff]
          %v223 = vld [vmem:[%s3] sm:$0xff]
          %v224 = vld [vmem:[%s3 + $0x8] sm:$0xff]
          %v225 = vld [vmem:[%s3 + $0x10] sm:$0xff]
          %v226 = vld [vmem:[%s3 + $0x18] sm:$0xff]
          %vm227 = vcmask 261120
          %v229 = vsel %vm227, %v222, 0
          %231 = vmatprep.subr.mxu0 0.0
          %232 = vmatpush1.msra.mxu0 0.0
          %233 = vmatprep.subr.mxu0 0.0
          %234 = vmatpush1.msra.mxu0 0.0
          %235 = vmatprep.subr.mxu0 0.0
          %236 = vmatpush1.msra.mxu0 0.0
          %237 = vmatprep.subr.mxu0 0.0
          %238 = vmatpush1.msra.mxu0 0.0
          %239 = vmatprep.subr.mxu0 0.0
          %240 = vmatpush1.msra.mxu0 0.0
          %241 = vmatprep.subr.mxu0 0.0
          %242 = vmatpush1.msra.mxu0 0.0
          %243 = vmatprep.subr.mxu0 0.0
          %244 = vmatpush1.msra.mxu0 0.0
          %245 = vmatprep.subr.mxu0 0.0
          %246 = vmatpush1.msra.mxu0 0.0
          %247 = vmatprep.subr.mxu0 0.0
          %248 = vmatpush1.msra.mxu0 0.0
          %249 = vmatprep.subr.mxu0 0.0
          %250 = vmatpush1.msra.mxu0 0.0
          %251 = vmatprep.subr.mxu0 0.0
          %252 = vmatpush1.msra.mxu0 0.0
          %253 = vmatprep.subr.mxu0 0.0
          %254 = vmatpush1.msra.mxu0 0.0
          %255 = vmatprep.subr.mxu0 0.0
          %256 = vmatpush1.msra.mxu0 %v226
          %257 = vmatprep.subr.mxu0 0.0
          %258 = vmatpush1.msra.mxu0 %v225
          %259 = vmatprep.subr.mxu0 0.0
          %260 = vmatpush1.msra.mxu0 %v224
          %261 = vmatprep.subr.mxu0 0.0
          %262 = vmatpush1.msra.mxu0 %v223
          %263 = vmatprep.subr.mxu0 0.0
          %264 = vmatpush2.msra.mxu0 0.0
          %265 = vmatprep.subr.mxu0 0.0
          %266 = vmatpush2.msra.mxu0 0.0
          %267 = vmatprep.subr.mxu0 0.0
          %268 = vmatpush2.msra.mxu0 0.0
          %269 = vmatprep.subr.mxu0 0.0
          %270 = vmatpush2.msra.mxu0 0.0
          %271 = vmatprep.subr.mxu0 0.0
          %272 = vmatpush2.msra.mxu0 0.0
          %273 = vmatprep.subr.mxu0 0.0
          %274 = vmatpush2.msra.mxu0 0.0
          %275 = vmatprep.subr.mxu0 0.0
          %276 = vmatpush2.msra.mxu0 0.0
          %277 = vmatprep.subr.mxu0 0.0
          %278 = vmatpush2.msra.mxu0 0.0
          %279 = vmatprep.subr.mxu0 0.0
          %280 = vmatpush2.msra.mxu0 0.0
          %281 = vmatprep.subr.mxu0 0.0
          %282 = vmatpush2.msra.mxu0 0.0
          %283 = vmatprep.subr.mxu0 0.0
          %284 = vmatpush2.msra.mxu0 0.0
          %285 = vmatprep.subr.mxu0 0.0
          %286 = vmatpush2.msra.mxu0 0.0
          %287 = vmatprep.subr.mxu0 0.0
          %288 = vmatpush2.msra.mxu0 0.0
          %289 = vmatprep.subr.mxu0 0.0
          %290 = vmatpush2.msra.mxu0 0.0
          %291 = vmatprep.subr.mxu0 0.0
          %292 = vmatpush2.msra.mxu0 0.0
          %293 = vmatprep.subr.mxu0 0.0
          %294 = vmatpush2.msra.mxu0 0.0
          %295 = vmatprep.mubr.f32.mxu0 0.0
          %296 = vmatmul.mubr.f32.gmra.mxu0 %v229
          %v297 = vpop.f32.mrf.mxu0
          %v298 = vadd.f32 0.0, %v297
          %v299 = vpop.f32.mrf.mxu0
          %300 = vdwg.mxu0
          %v302 = vsel %vm227, %v217, 0
          %304 = vmatprep.subr.mxu0 0.0
          %305 = vmatpush1.msra.mxu0 0.0
          %306 = vmatprep.subr.mxu0 0.0
          %307 = vmatpush1.msra.mxu0 0.0
          %308 = vmatprep.subr.mxu0 0.0
          %309 = vmatpush1.msra.mxu0 0.0
          %310 = vmatprep.subr.mxu0 0.0
          %311 = vmatpush1.msra.mxu0 0.0
          %312 = vmatprep.subr.mxu0 0.0
          %313 = vmatpush1.msra.mxu0 0.0
          %314 = vmatprep.subr.mxu0 0.0
          %315 = vmatpush1.msra.mxu0 0.0
          %316 = vmatprep.subr.mxu0 0.0
          %317 = vmatpush1.msra.mxu0 0.0
          %318 = vmatprep.subr.mxu0 0.0
          %319 = vmatpush1.msra.mxu0 0.0
          %320 = vmatprep.subr.mxu0 0.0
          %321 = vmatpush1.msra.mxu0 0.0
          %322 = vmatprep.subr.mxu0 0.0
          %323 = vmatpush1.msra.mxu0 0.0
          %324 = vmatprep.subr.mxu0 0.0
          %325 = vmatpush1.msra.mxu0 0.0
          %326 = vmatprep.subr.mxu0 0.0
          %327 = vmatpush1.msra.mxu0 0.0
          %328 = vmatprep.subr.mxu0 0.0
          %329 = vmatpush1.msra.mxu0 %v221
          %330 = vmatprep.subr.mxu0 0.0
          %331 = vmatpush1.msra.mxu0 %v220
          %332 = vmatprep.subr.mxu0 0.0
          %333 = vmatpush1.msra.mxu0 %v219
          %334 = vmatprep.subr.mxu0 0.0
          %335 = vmatpush1.msra.mxu0 %v218
          %336 = vmatprep.subr.mxu0 0.0
          %337 = vmatpush2.msra.mxu0 0.0
          %338 = vmatprep.subr.mxu0 0.0
          %339 = vmatpush2.msra.mxu0 0.0
          %340 = vmatprep.subr.mxu0 0.0
          %341 = vmatpush2.msra.mxu0 0.0
          %342 = vmatprep.subr.mxu0 0.0
          %343 = vmatpush2.msra.mxu0 0.0
          %344 = vmatprep.subr.mxu0 0.0
          %345 = vmatpush2.msra.mxu0 0.0
          %346 = vmatprep.subr.mxu0 0.0
          %347 = vmatpush2.msra.mxu0 0.0
          %348 = vmatprep.subr.mxu0 0.0
          %349 = vmatpush2.msra.mxu0 0.0
          %350 = vmatprep.subr.mxu0 0.0
          %351 = vmatpush2.msra.mxu0 0.0
          %352 = vmatprep.subr.mxu0 0.0
          %353 = vmatpush2.msra.mxu0 0.0
          %354 = vmatprep.subr.mxu0 0.0
          %355 = vmatpush2.msra.mxu0 0.0
          %356 = vmatprep.subr.mxu0 0.0
          %357 = vmatpush2.msra.mxu0 0.0
          %358 = vmatprep.subr.mxu0 0.0
          %359 = vmatpush2.msra.mxu0 0.0
          %360 = vmatprep.subr.mxu0 0.0
          %361 = vmatpush2.msra.mxu0 0.0
          %362 = vmatprep.subr.mxu0 0.0
          %363 = vmatpush2.msra.mxu0 0.0
          %364 = vmatprep.subr.mxu0 0.0
          %365 = vmatpush2.msra.mxu0 0.0
          %366 = vmatprep.subr.mxu0 0.0
          %367 = vmatpush2.msra.mxu0 0.0
          %368 = vmatprep.mubr.f32.mxu0 0.0
          %369 = vmatmul.mubr.f32.gmra.mxu0 %v302
          %v370 = vpop.f32.mrf.mxu0
          %v371 = vadd.f32 %v298, %v370
          %v372 = vpop.f32.mrf.mxu0
          %373 = vdwg.mxu0
          %v374 = vld [vmem:[%s4] sm:$0x1]
          %v376 = vlaneseq
          %v377 = vshrl.u32 %v376, 7
          %v378 = vsub.s32 0, %v377
          %v379 = vrot.slane %v374, %v378
          %v381 = vadd.f32 %v371, %v379
          %v382 = vxor.u32 %v381, 2147483648
          %v383 = vmul.f32 %v382, 1.442695
          %v384 = vpow.pop %v383
          %v385 = vadd.f32 %v384, 1.0
          %v386 = vrcp.pop %v385
          %v387 = vmul.f32 1.0, %v386
          %v388 = vtanh.pop %v381
          %v389 = vld [vmem:[#allocation3] sm:$0xff]
          %391 = vrot.lane.b32.xlu0 %v389, 32
          %v392 = vpop.permute.xlu0 %391
          %v394 = vmul.f32 %v387, %v392
          %396 = vrot.lane.b32.xlu0 %v388, 32
          %v397 = vpop.permute.xlu0 %396
          %v399 = vmul.f32 %v387, %v397
          %401 = vrot.lane.b32.xlu0 %v399, 32
          %v402 = vpop.permute.xlu0 %401
          %v404 = vadd.f32 %v394, %v402
          %406 = vrot.lane.b32.xlu0 %v404, 96
          %v407 = vpop.permute.xlu0 %406
          %409 = vst.msk [vmem:[#allocation3] sm:$0xff] %vm227, %v407
          %v410 = vtanh.pop %v404
          %412 = vrot.lane.b32.xlu0 %v410, 32
          %v413 = vpop.permute.xlu0 %412
          %v415 = vmul.f32 %v387, %v413
          %417 = vrot.lane.b32.xlu0 %v415, 64
          %v418 = vpop.permute.xlu0 %417
          %420 = vst.msk [vmem:[#allocation2] sm:$0xff] %vm227, %v418
          %v421 = vpack.c.bf16 %v415, %v415
          %v423 = vunpack.c.l.b16 %v421
          %v424 = vpack.c.b16 %v423, %v423
          %425 = vrot.lane.b32.xlu0 %v424, 64
          %v426 = vpop.permute.xlu0 %425
          %vm428 = vcmask 257024
          %429 = vst.msk [vmem:[#allocation5] sm:$0xf] %vm428, %v426
          %vm430 = vcmask 7168
          %431 = vst.msk [vmem:[#allocation6] sm:$0xff] %vm430, -1e+30
          %432 = vst.msk [vmem:[#allocation7] sm:$0xff] %vm430, 0.0
          %433 = vst.msk [vmem:[#allocation8] sm:$0xff] %vm227, 0.0
        $region48: #{tpu_custom_call.1} parent=39 // pred_fallthru
          _
        %s434 = smul.u32 %s22, 128
        %s435 = sshra.s32 %s434, 3
        %s436 = sand.u32 %s434, 7
        %s437 = smul.addr %s435, 4
        %s438 = scalar_lea.vmem %s0, %s437
        %v439 = vld [vmem:[%s438] sm:$0xf]
        %v440 = vld [vmem:[%s438 + $0x4] sm:$0xf]
        %v441 = vld [vmem:[%s438 + $0x8] sm:$0xf]
        %v442 = vld [vmem:[%s438 + $0xc] sm:$0xf]
        %v443 = vld [vmem:[%s438 + $0x10] sm:$0xf]
        %v444 = vld [vmem:[%s438 + $0x14] sm:$0xf]
        %v445 = vld [vmem:[%s438 + $0x18] sm:$0xf]
        %v446 = vld [vmem:[%s438 + $0x1c] sm:$0xf]
        %v447 = vld [vmem:[%s438 + $0x20] sm:$0xf]
        %v448 = vld [vmem:[%s438 + $0x24] sm:$0xf]
        %v449 = vld [vmem:[%s438 + $0x28] sm:$0xf]
        %v450 = vld [vmem:[%s438 + $0x2c] sm:$0xf]
        %v451 = vld [vmem:[%s438 + $0x30] sm:$0xf]
        %v452 = vld [vmem:[%s438 + $0x34] sm:$0xf]
        %v453 = vld [vmem:[%s438 + $0x38] sm:$0xf]
        %v454 = vld [vmem:[%s438 + $0x3c] sm:$0xf]
        %s455 = sshra.s32 %s434, 7
        %s456 = sand.u32 %s434, 127
        %s457 = scalar_lea.vmem %s1, %s455
        %v458 = vld [vmem:[%s457] sm:$0x1]
        %v459 = vld [vmem:[#allocation5] sm:$0xf]
        %v476 = vunpack.c.l.b16 %v439
        %v477 = vunpack.c.l.b16 %v440
        %v478 = vunpack.c.l.b16 %v441
        %v479 = vunpack.c.l.b16 %v442
        %v480 = vunpack.c.l.b16 %v443
        %v481 = vunpack.c.l.b16 %v444
        %v482 = vunpack.c.l.b16 %v445
        %v483 = vunpack.c.l.b16 %v446
        %v484 = vunpack.c.l.b16 %v447
        %v485 = vunpack.c.l.b16 %v448
        %v486 = vunpack.c.l.b16 %v449
        %v487 = vunpack.c.l.b16 %v450
        %v488 = vunpack.c.l.b16 %v451
        %v489 = vunpack.c.l.b16 %v452
        %v490 = vunpack.c.l.b16 %v453
        %v491 = vunpack.c.l.b16 %v454
        %v492 = vpack.c.b16 %v477, %v476
        %v493 = vpack.c.b16 %v479, %v478
        %v494 = vpack.c.b16 %v481, %v480
        %v495 = vpack.c.b16 %v483, %v482
        %v496 = vpack.c.b16 %v485, %v484
        %v497 = vpack.c.b16 %v487, %v486
        %v498 = vpack.c.b16 %v489, %v488
        %v499 = vpack.c.b16 %v491, %v490
        %vm500 = vcmask 261120
        %v502 = vsel %vm500, %v459, 0
        %v505 = vsel %vm500, %v492, 0
        %v508 = vsel %vm500, %v493, 0
        %v511 = vsel %vm500, %v494, 0
        %v514 = vsel %vm500, %v495, 0
        %v517 = vsel %vm500, %v496, 0
        %v520 = vsel %vm500, %v497, 0
        %v523 = vsel %vm500, %v498, 0
        %v526 = vsel %vm500, %v499, 0
        %528 = vmatprep.subr.bf16.mxu0 0
        %529 = vmatpush1.bf16.xpose.msra.mxu0 %v526
        %530 = vmatprep.subr.bf16.mxu0 0
        %531 = vmatpush1.bf16.xpose.msra.mxu0 %v523
        %532 = vmatprep.subr.bf16.mxu0 0
        %533 = vmatpush1.bf16.xpose.msra.mxu0 %v520
        %534 = vmatprep.subr.bf16.mxu0 0
        %535 = vmatpush1.bf16.xpose.msra.mxu0 %v517
        %536 = vmatprep.subr.bf16.mxu0 0
        %537 = vmatpush1.bf16.xpose.msra.mxu0 %v514
        %538 = vmatprep.subr.bf16.mxu0 0
        %539 = vmatpush1.bf16.xpose.msra.mxu0 %v511
        %540 = vmatprep.subr.bf16.mxu0 0
        %541 = vmatpush1.bf16.xpose.msra.mxu0 %v508
        %542 = vmatprep.subr.bf16.mxu0 0
        %543 = vmatpush1.bf16.xpose.msra.mxu0 %v505
        %544 = vmatprep.subr.bf16.mxu0 0
        %545 = vmatpush2.bf16.xpose.msra.mxu0 0
        %546 = vmatprep.subr.bf16.mxu0 0
        %547 = vmatpush2.bf16.xpose.msra.mxu0 0
        %548 = vmatprep.subr.bf16.mxu0 0
        %549 = vmatpush2.bf16.xpose.msra.mxu0 0
        %550 = vmatprep.subr.bf16.mxu0 0
        %551 = vmatpush2.bf16.xpose.msra.mxu0 0
        %552 = vmatprep.subr.bf16.mxu0 0
        %553 = vmatpush2.bf16.xpose.msra.mxu0 0
        %554 = vmatprep.subr.bf16.mxu0 0
        %555 = vmatpush2.bf16.xpose.msra.mxu0 0
        %556 = vmatprep.subr.bf16.mxu0 0
        %557 = vmatpush2.bf16.xpose.msra.mxu0 0
        %558 = vmatprep.subr.bf16.mxu0 0
        %559 = vmatpush2.bf16.xpose.msra.mxu0 0
        %560 = vmatprep.mubr.bf16.mxu0 0
        %561 = vmatmul.mubr.bf16.gmra.mxu0 %v502
        %v562 = vpop.f32.mrf.mxu0
        %v563 = vadd.f32 0.0, %v562
        %v564 = vpop.f32.mrf.mxu0
        %v565 = vpop.f32.mrf.mxu0
        %v566 = vpop.f32.mrf.mxu0
        %567 = vdwg.mxu0
        %v568 = vlaneseq
        %v569 = vshrl.u32 %v568, 7
        %v570 = vlaneseq
        %v571 = vshrl.u32 %v570, 7
        %v572 = vsub.s32 0, %v571
        %v573 = vrot.slane %v458, %v572
        %vm574 = vcmp.eq.s32.totalorder %v569, %v573
        %v575 = vsel %vm574, %v563, -1e+30
        %v576 = vld [vmem:[#allocation6] sm:$0xff]
        %577 = vmax.xlane.f32.xlu0 %v575
        %v578 = vpop.xlane.xlu0 %577
        %v579 = vmax.f32 %v576, %v578
        %v580 = vsub.f32 %v576, %v579
        %v581 = vmul.f32 %v580, 1.442695
        %v582 = vpow.pop %v581
        %584 = vset.pattern.permute.xlu0 0
        %585 = vperm.xlu0 %584, %v579
        %v586 = vpop.permute.xlu0 %585
        %v588 = vsub.f32 %v575, %v586
        %v589 = vmul.f32 %v588, 1.442695
        %v590 = vpow.pop %v589
        %v591 = vsel %vm574, %v590, 0.0
        %v592 = vld [vmem:[#allocation7] sm:$0xff]
        %v593 = vmul.f32 %v582, %v592
        %594 = vadd.xlane.f32.xlu0 %v591
        %v595 = vpop.xlane.xlu0 %594
        %v596 = vadd.f32 %v593, %v595
        %vm597 = vcmask 7168
        %598 = vst.msk [vmem:[#allocation7] sm:$0xff] %vm597, %v596
        %v599 = vld [vmem:[#allocation8] sm:$0xff]
        %601 = vset.pattern.permute.xlu0 0
        %602 = vperm.xlu0 %601, %v582
        %v603 = vpop.permute.xlu0 %602
        %v605 = vmul.f32 %v603, %v599
        %v606 = vpack.c.bf16 %v591, %v591
        %615 = vmatprep.subr.bf16.mxu0 0
        %616 = vmatpush1.bf16.msra.mxu0 %v499
        %617 = vmatprep.subr.bf16.mxu0 0
        %618 = vmatpush1.bf16.msra.mxu0 %v498
        %619 = vmatprep.subr.bf16.mxu0 0
        %620 = vmatpush1.bf16.msra.mxu0 %v497
        %621 = vmatprep.subr.bf16.mxu0 0
        %622 = vmatpush1.bf16.msra.mxu0 %v496
        %623 = vmatprep.subr.bf16.mxu0 0
        %624 = vmatpush1.bf16.msra.mxu0 %v495
        %625 = vmatprep.subr.bf16.mxu0 0
        %626 = vmatpush1.bf16.msra.mxu0 %v494
        %627 = vmatprep.subr.bf16.mxu0 0
        %628 = vmatpush1.bf16.msra.mxu0 %v493
        %629 = vmatprep.subr.bf16.mxu0 0
        %630 = vmatpush1.bf16.msra.mxu0 %v492
        %631 = vmatprep.subr.bf16.mxu0 0
        %632 = vmatpush2.bf16.msra.mxu0 0
        %633 = vmatprep.subr.bf16.mxu0 0
        %634 = vmatpush2.bf16.msra.mxu0 0
        %635 = vmatprep.subr.bf16.mxu0 0
        %636 = vmatpush2.bf16.msra.mxu0 0
        %637 = vmatprep.subr.bf16.mxu0 0
        %638 = vmatpush2.bf16.msra.mxu0 0
        %639 = vmatprep.subr.bf16.mxu0 0
        %640 = vmatpush2.bf16.msra.mxu0 0
        %641 = vmatprep.subr.bf16.mxu0 0
        %642 = vmatpush2.bf16.msra.mxu0 0
        %643 = vmatprep.subr.bf16.mxu0 0
        %644 = vmatpush2.bf16.msra.mxu0 0
        %645 = vmatprep.subr.bf16.mxu0 0
        %646 = vmatpush2.bf16.msra.mxu0 0
        %647 = vmatprep.mubr.bf16.mxu0 0
        %648 = vmatmul.mubr.bf16.gmra.mxu0 %v606
        %v649 = vpop.f32.mrf.mxu0
        %v650 = vadd.f32 0.0, %v649
        %v651 = vpop.f32.mrf.mxu0
        %v652 = vpop.f32.mrf.mxu0
        %v653 = vpop.f32.mrf.mxu0
        %654 = vdwg.mxu0
        %v655 = vadd.f32 %v605, %v650
        %656 = vst.msk [vmem:[#allocation8] sm:$0xff] %vm500, %v655
        %657 = vst.msk [vmem:[#allocation6] sm:$0xff] %vm597, %v579
        // Predicated region
        $region49: #{tpu_custom_call.1} parent=39 // pred_check
          %p658 = pneg %p205
        $region50: #{tpu_custom_call.1} parent=39 // pred_check_branch
          %660 = sbr.rel (%p658) target = $region52
        $region51: #{tpu_custom_call.1} parent=39 // pred_region
          %v661 = vld [vmem:[#allocation7] sm:$0xff]
          %vm662 = vcmp.gt.f32.partialorder %v661, 0.0
          %v663 = vsel %vm662, %v661, 1.0
          %v664 = vld [vmem:[#allocation8] sm:$0xff]
          %v665 = vrcp.pop %v663
          %667 = vset.pattern.permute.xlu0 0
          %668 = vperm.xlu0 %667, %v665
          %v669 = vpop.permute.xlu0 %668
          %v671 = vmul.f32 %v664, %v669
          %672 = vst.msk [vmem:[#allocation4] sm:$0xff] %vm500, %v671
        $region52: #{tpu_custom_call.1} parent=39 // pred_fallthru
          _
        %p673 = scmp.eq.s32.totalorder %s21, 2
        %p674 = pnand %p205, %p673
        %p675 = pneg %p674
        // Predicated region
        $region53: #{tpu_custom_call.1} parent=39 // pred_check
          _
        $region54: #{tpu_custom_call.1} parent=39 // pred_check_branch
          %677 = sbr.rel (%p674) target = $region56
        $region55: #{tpu_custom_call.1} parent=39 // pred_region
          %v678 = vld [vmem:[#allocation2] sm:$0xff]
          %v679 = vld [vmem:[#allocation4] sm:$0xff]
          %681 = vrot.lane.b32.xlu0 %v679, 32
          %v682 = vpop.permute.xlu0 %681
          %v684 = vsel %vm500, %v678, %v682
          %vm685 = vcmask 523264
          %686 = vst.msk [vmem:[#allocation9] sm:$0xff] %vm685, %v684
        $region56: #{tpu_custom_call.1} parent=39 // pred_fallthru
          _
        // Predicated region
        $region57: #{tpu_custom_call.1} parent=39 // pred_check
          %p687 = pneg %p147
        $region58: #{tpu_custom_call.1} parent=39 // pred_check_branch
          %689 = sbr.rel (%p687) target = $region60
        $region59: #{tpu_custom_call.1} parent=39 // pred_region
          %s691 = ssub.s32 128, 128
          %692 = vsyncadd [#allocation10], %s691
          %s694 = sshll.u32 [#allocation9], 4
          %s695 = int_to_ptr.vmem [resolvable:$true] %s694
          %697 = dma.vmem_to_hbm [thread:$0]  %s695, 128, %s5, [#allocation10]
        $region60: #{tpu_custom_call.1} parent=39 // pred_fallthru
          _
        // Predicated region
        $region61: #{tpu_custom_call.1} parent=39 // pred_check
          %p698 = pneg %p147
        $region62: #{tpu_custom_call.1} parent=39 // pred_check_branch
          %700 = sbr.rel (%p698) target = $region64
        $region63: #{tpu_custom_call.1} parent=39 // pred_region
          %701 = dma.done [#allocation10], 128
        $region64: #{tpu_custom_call.1} parent=39 // pred_fallthru
          _
      $region40: #{tpu_custom_call.1} parent=5 // pred_fallthru
        _
      %p702 = scmp.le.s32.totalorder 2, %s12
      // Predicated region
      $region65: #{tpu_custom_call.1} parent=5 // pred_check
        %p703 = pneg %p702
      $region66: #{tpu_custom_call.1} parent=5 // pred_check_branch
        %705 = sbr.rel (%p703) target = $region68
      $region67: #{tpu_custom_call.1} parent=5 // pred_region
        %s706 = ssub.s32 %s12, 2
      $region68: #{tpu_custom_call.1} parent=5 // pred_fallthru
        _
    $region6: #{tpu_custom_call.1} parent=1 // loop_footer
      %s16 = sadd.s32 1, %s12
    $region7: #{tpu_custom_call.1} parent=1 // loop_footer_branch
      %11 = sbr.rel target = $region3
    $region8: #{tpu_custom_call.1} parent=1 // loop_exit
      _
    %707 = vsyncpa [#allocation10], 1
    %s708 = scalar_lea.sflag [#allocation10], 1
    %709 = vsyncpa %s708, 1

</llo_original>
